<compile_context>
chip_gen: v6e
topology: v6e:2x2x1
jax: 0.10.0
libtpu: 0.0.40
codegen_flags: <defaults>
</compile_context>

<pallas_src>
import jax
import jax.numpy as jnp
from jax.experimental import pallas as pl
from jax.experimental.pallas import tpu as pltpu

D_IN = 28 * 28                                      # 784
LAYER_DIMS = [(D_IN, 128), (128, 64), (64, 20),     # encoder
              (20, 64), (64, 128), (128, D_IN)]     # decoder


def _round_up(x, m):
    return (x + m - 1) // m * m


def _autoencoder_kernel(x_ref,
                        w1_ref, b1_ref, w2_ref, b2_ref, w3_ref, b3_ref,
                        w4_ref, b4_ref, w5_ref, b5_ref, w6_ref, b6_ref,
                        o_ref):
    w_refs = (w1_ref, w2_ref, w3_ref, w4_ref, w5_ref, w6_ref)
    b_refs = (b1_ref, b2_ref, b3_ref, b4_ref, b5_ref, b6_ref)

    # f32 -> bf16 cast of the input happens in-kernel (VPU op hidden under MXU).
    h = x_ref[...].astype(jnp.bfloat16)                        # (tb, 784)
    for layer in range(6):
        # bf16 MXU operands, f32 accumulation; bias-add / nonlinearity in f32.
        a = jnp.dot(h, w_refs[layer][...],
                    preferred_element_type=jnp.float32) + b_refs[layer][...]
        if layer < 5:
            h = jnp.maximum(a, 0.0).astype(jnp.bfloat16)       # ReLU -> next dot
        else:
            h = jax.nn.sigmoid(a)                              # final sigmoid (f32)
    o_ref[...] = h.astype(o_ref.dtype)


def init_params(key):
    """Deterministic PyTorch-style init: U(-1/sqrt(fan_in), 1/sqrt(fan_in))."""
    params = []
    for (fan_in, fan_out) in LAYER_DIMS:
        key, kw, kb = jax.random.split(key, 3)
        bound = 1.0 / (fan_in ** 0.5)
        w = jax.random.uniform(kw, (fan_in, fan_out), jnp.float32, -bound, bound)
        b = jax.random.uniform(kb, (1, fan_out), jnp.float32, -bound, bound)
        params.append((w, b))
    return params


def prepare_params(params):
    """One-time cast: weights -> bf16 (MXU operands), biases -> f32 (1, N).

    Hoisted out of the per-call path so casts don't re-run every forward.
    """
    return [(jnp.asarray(w, jnp.bfloat16),
             jnp.asarray(b, jnp.float32).reshape(1, -1)) for (w, b) in params]


def _pick_batch_tile(B, batch_tile):
    if B <= batch_tile:
        return _round_up(B, 16)          # 16-row aligned (bf16 sublane packing)
    # Large batch: keep >= 4 grid steps so both v7x TensorCores get work and
    # per-step overhead stays amortized; tile stays 256-row aligned.
    return min(batch_tile, max(256, _round_up(pl.cdiv(B, 4), 256)))


def autoencoder_forward(x_nchw, prepped_params, *, batch_tile=512):
    orig_shape = x_nchw.shape
    orig_dtype = x_nchw.dtype
    B = orig_shape[0]
    x_flat = x_nchw.reshape(B, -1)                 # same as torch .view(B, -1)
    assert x_flat.shape[1] == D_IN

    tb = _pick_batch_tile(B, batch_tile)
    B_pad = _round_up(B, tb)
    grid = (B_pad // tb,)

    if B_pad != B:                                 # pad batch only when needed
        x_flat = jnp.pad(x_flat, ((0, B_pad - B), (0, 0)))

    # ---- block specs -------------------------------------------------------
    # (tb, 784): last dim equals the full array dim, so the (8,128) rule is
    # satisfied; the 16-lane tail goes to a cheap masked store.
    x_spec = pl.BlockSpec((tb, D_IN), lambda i: (i, 0))
    o_spec = pl.BlockSpec((tb, D_IN), lambda i: (i, 0))

    param_specs = []
    flat_params = []
    for (w, b) in prepped_params:
        # constant index_map -> weights/biases resident across the batch grid
        param_specs.append(pl.BlockSpec(w.shape, lambda i: (0, 0)))
        param_specs.append(pl.BlockSpec(b.shape, lambda i: (0, 0)))
        flat_params.append(w)
        flat_params.append(b)

    # ---- scheduler hints -----------------------------------------------------
    flops_per_row = 2 * sum(k * n for (k, n) in LAYER_DIMS)
    weight_bytes = sum(int(w.size) * w.dtype.itemsize
                       + int(b.size) * b.dtype.itemsize
                       for (w, b) in prepped_params)
    cost = pl.CostEstimate(
        flops=int(B_pad) * flops_per_row,
        transcendentals=int(B_pad) * D_IN,                    # final sigmoid
        bytes_accessed=int(B_pad) * D_IN * (4 + 4) + weight_bytes)

    out = pl.pallas_call(
        _autoencoder_kernel,
        out_shape=jax.ShapeDtypeStruct((B_pad, D_IN), orig_dtype),
        grid_spec=pltpu.PrefetchScalarGridSpec(
            num_scalar_prefetch=0,
            grid=grid,
            in_specs=[x_spec] + param_specs,
            out_specs=o_spec,
        ),
        compiler_params=pltpu.CompilerParams(
            dimension_semantics=("parallel",),
            vmem_limit_bytes=48 * 1024 * 1024,
        ),
        cost_estimate=cost,
    )(x_flat, *flat_params)

    if B_pad != B:
        out = out[:B]
    return out.reshape(orig_shape)


def _reference_forward(x_nchw, params):
    """Pure-JAX f32 reference matching the PyTorch module."""
    B = x_nchw.shape[0]
    h = x_nchw.reshape(B, -1)
    for l, (w, b) in enumerate(params):
        h = h @ w + b
        h = jnp.maximum(h, 0.0) if l < len(params) - 1 else jax.nn.sigmoid(h)
    return h.reshape(x_nchw.shape)


if __name__ == "__main__":
    key = jax.random.PRNGKey(0)
    k_x, k_p = jax.random.split(key)

    # small MNIST-like batch: (B, 1, 28, 28)
    x = jax.random.uniform(k_x, (8, 1, 28, 28), jnp.float32)
    params = init_params(k_p)
    prepped = prepare_params(params)        # one-time weight cast (not per-call)

    out = autoencoder_forward(x, prepped)
    jax.block_until_ready(out)

    assert out.shape == x.shape
    assert out.dtype == x.dtype

    # bf16 MXU inputs with f32 accumulation -> loose tolerance vs f32 reference
    ref = _reference_forward(x, params)
    max_err = float(jnp.max(jnp.abs(out - ref)))
    assert max_err < 5e-2, f"max abs err {max_err}"

    print("KERNEL_OK")
</pallas_src>

<mosaic_0001>
module attributes {stable_mosaic.version = 11 : i64} {
  func.func @_autoencoder_kernel(%arg0: i32, %arg1: memref<16x784xf32, #tpu.memory_space<vmem>>, %arg2: memref<784x128xbf16, #tpu.memory_space<vmem>>, %arg3: memref<1x128xf32, #tpu.memory_space<vmem>>, %arg4: memref<128x64xbf16, #tpu.memory_space<vmem>>, %arg5: memref<1x64xf32, #tpu.memory_space<vmem>>, %arg6: memref<64x20xbf16, #tpu.memory_space<vmem>>, %arg7: memref<1x20xf32, #tpu.memory_space<vmem>>, %arg8: memref<20x64xbf16, #tpu.memory_space<vmem>>, %arg9: memref<1x64xf32, #tpu.memory_space<vmem>>, %arg10: memref<64x128xbf16, #tpu.memory_space<vmem>>, %arg11: memref<1x128xf32, #tpu.memory_space<vmem>>, %arg12: memref<128x784xbf16, #tpu.memory_space<vmem>>, %arg13: memref<1x784xf32, #tpu.memory_space<vmem>>, %arg14: memref<16x784xf32, #tpu.memory_space<vmem>>) attributes {dimension_semantics = [#tpu.dimension_semantics<parallel>], iteration_bounds = array<i64: 1>, scalar_prefetch = 0 : i64, scratch_operands = 0 : i64, tpu.core_type = #tpu.core_type<tc>, window_params = [{transform_indices = @transform_0, window_bounds = array<i64: 16, 784>}, {pipeline_mode = #tpu.pipeline_mode<synchronous>, transform_indices = @transform_1, window_bounds = array<i64: 784, 128>}, {pipeline_mode = #tpu.pipeline_mode<synchronous>, transform_indices = @transform_2, window_bounds = array<i64: 1, 128>}, {pipeline_mode = #tpu.pipeline_mode<synchronous>, transform_indices = @transform_3, window_bounds = array<i64: 128, 64>}, {pipeline_mode = #tpu.pipeline_mode<synchronous>, transform_indices = @transform_4, window_bounds = array<i64: 1, 64>}, {pipeline_mode = #tpu.pipeline_mode<synchronous>, transform_indices = @transform_5, window_bounds = array<i64: 64, 20>}, {pipeline_mode = #tpu.pipeline_mode<synchronous>, transform_indices = @transform_6, window_bounds = array<i64: 1, 20>}, {pipeline_mode = #tpu.pipeline_mode<synchronous>, transform_indices = @transform_7, window_bounds = array<i64: 20, 64>}, {pipeline_mode = #tpu.pipeline_mode<synchronous>, transform_indices = @transform_8, window_bounds = array<i64: 1, 64>}, {pipeline_mode = #tpu.pipeline_mode<synchronous>, transform_indices = @transform_9, window_bounds = array<i64: 64, 128>}, {pipeline_mode = #tpu.pipeline_mode<synchronous>, transform_indices = @transform_10, window_bounds = array<i64: 1, 128>}, {pipeline_mode = #tpu.pipeline_mode<synchronous>, transform_indices = @transform_11, window_bounds = array<i64: 128, 784>}, {pipeline_mode = #tpu.pipeline_mode<synchronous>, transform_indices = @transform_12, window_bounds = array<i64: 1, 784>}, {transform_indices = @transform_13, window_bounds = array<i64: 16, 784>}]} {
    %c0 = arith.constant 0 : index
    %c0_0 = arith.constant 0 : index
    %0 = vector.load %arg1[%c0, %c0_0] : memref<16x784xf32, #tpu.memory_space<vmem>>, vector<16x784xf32>
    %1 = arith.truncf %0 : vector<16x784xf32> to vector<16x784xbf16>
    %c0_1 = arith.constant 0 : index
    %c0_2 = arith.constant 0 : index
    %2 = vector.load %arg2[%c0_1, %c0_2] : memref<784x128xbf16, #tpu.memory_space<vmem>>, vector<784x128xbf16>
    %cst = arith.constant dense<0.000000e+00> : vector<16x128xf32>
    %3 = tpu.matmul %1, %2, %cst {dimension_numbers = #tpu.dot_dimension_numbers<[1], [0], [0], [1], [0, 0, 1, 1], [], []>} : vector<16x784xbf16>, vector<784x128xbf16>, vector<16x128xf32> -> vector<16x128xf32>
    %c0_3 = arith.constant 0 : index
    %c0_4 = arith.constant 0 : index
    %4 = vector.load %arg3[%c0_3, %c0_4] : memref<1x128xf32, #tpu.memory_space<vmem>>, vector<1x128xf32>
    %5 = vector.broadcast %4 : vector<1x128xf32> to vector<16x128xf32>
    %6 = arith.addf %3, %5 : vector<16x128xf32>
    %cst_5 = arith.constant 0.000000e+00 : f32
    %7 = vector.broadcast %cst_5 : f32 to vector<16x128xf32>
    %8 = arith.maximumf %6, %7 : vector<16x128xf32>
    %9 = arith.truncf %8 : vector<16x128xf32> to vector<16x128xbf16>
    %c0_6 = arith.constant 0 : index
    %c0_7 = arith.constant 0 : index
    %10 = vector.load %arg4[%c0_6, %c0_7] : memref<128x64xbf16, #tpu.memory_space<vmem>>, vector<128x64xbf16>
    %cst_8 = arith.constant dense<0.000000e+00> : vector<16x64xf32>
    %11 = tpu.matmul %9, %10, %cst_8 {dimension_numbers = #tpu.dot_dimension_numbers<[1], [0], [0], [1], [0, 0, 1, 1], [], []>} : vector<16x128xbf16>, vector<128x64xbf16>, vector<16x64xf32> -> vector<16x64xf32>
    %c0_9 = arith.constant 0 : index
    %c0_10 = arith.constant 0 : index
    %12 = vector.load %arg5[%c0_9, %c0_10] : memref<1x64xf32, #tpu.memory_space<vmem>>, vector<1x64xf32>
    %13 = vector.broadcast %12 : vector<1x64xf32> to vector<16x64xf32>
    %14 = arith.addf %11, %13 : vector<16x64xf32>
    %cst_11 = arith.constant 0.000000e+00 : f32
    %15 = vector.broadcast %cst_11 : f32 to vector<16x64xf32>
    %16 = arith.maximumf %14, %15 : vector<16x64xf32>
    %17 = arith.truncf %16 : vector<16x64xf32> to vector<16x64xbf16>
    %c0_12 = arith.constant 0 : index
    %c0_13 = arith.constant 0 : index
    %18 = vector.load %arg6[%c0_12, %c0_13] : memref<64x20xbf16, #tpu.memory_space<vmem>>, vector<64x20xbf16>
    %cst_14 = arith.constant dense<0.000000e+00> : vector<16x20xf32>
    %19 = tpu.matmul %17, %18, %cst_14 {dimension_numbers = #tpu.dot_dimension_numbers<[1], [0], [0], [1], [0, 0, 1, 1], [], []>} : vector<16x64xbf16>, vector<64x20xbf16>, vector<16x20xf32> -> vector<16x20xf32>
    %c0_15 = arith.constant 0 : index
    %c0_16 = arith.constant 0 : index
    %20 = vector.load %arg7[%c0_15, %c0_16] : memref<1x20xf32, #tpu.memory_space<vmem>>, vector<1x20xf32>
    %21 = vector.broadcast %20 : vector<1x20xf32> to vector<16x20xf32>
    %22 = arith.addf %19, %21 : vector<16x20xf32>
    %cst_17 = arith.constant 0.000000e+00 : f32
    %23 = vector.broadcast %cst_17 : f32 to vector<16x20xf32>
    %24 = arith.maximumf %22, %23 : vector<16x20xf32>
    %25 = arith.truncf %24 : vector<16x20xf32> to vector<16x20xbf16>
    %c0_18 = arith.constant 0 : index
    %c0_19 = arith.constant 0 : index
    %26 = vector.load %arg8[%c0_18, %c0_19] : memref<20x64xbf16, #tpu.memory_space<vmem>>, vector<20x64xbf16>
    %cst_20 = arith.constant dense<0.000000e+00> : vector<16x64xf32>
    %27 = tpu.matmul %25, %26, %cst_20 {dimension_numbers = #tpu.dot_dimension_numbers<[1], [0], [0], [1], [0, 0, 1, 1], [], []>} : vector<16x20xbf16>, vector<20x64xbf16>, vector<16x64xf32> -> vector<16x64xf32>
    %c0_21 = arith.constant 0 : index
    %c0_22 = arith.constant 0 : index
    %28 = vector.load %arg9[%c0_21, %c0_22] : memref<1x64xf32, #tpu.memory_space<vmem>>, vector<1x64xf32>
    %29 = vector.broadcast %28 : vector<1x64xf32> to vector<16x64xf32>
    %30 = arith.addf %27, %29 : vector<16x64xf32>
    %cst_23 = arith.constant 0.000000e+00 : f32
    %31 = vector.broadcast %cst_23 : f32 to vector<16x64xf32>
    %32 = arith.maximumf %30, %31 : vector<16x64xf32>
    %33 = arith.truncf %32 : vector<16x64xf32> to vector<16x64xbf16>
    %c0_24 = arith.constant 0 : index
    %c0_25 = arith.constant 0 : index
    %34 = vector.load %arg10[%c0_24, %c0_25] : memref<64x128xbf16, #tpu.memory_space<vmem>>, vector<64x128xbf16>
    %cst_26 = arith.constant dense<0.000000e+00> : vector<16x128xf32>
    %35 = tpu.matmul %33, %34, %cst_26 {dimension_numbers = #tpu.dot_dimension_numbers<[1], [0], [0], [1], [0, 0, 1, 1], [], []>} : vector<16x64xbf16>, vector<64x128xbf16>, vector<16x128xf32> -> vector<16x128xf32>
    %c0_27 = arith.constant 0 : index
    %c0_28 = arith.constant 0 : index
    %36 = vector.load %arg11[%c0_27, %c0_28] : memref<1x128xf32, #tpu.memory_space<vmem>>, vector<1x128xf32>
    %37 = vector.broadcast %36 : vector<1x128xf32> to vector<16x128xf32>
    %38 = arith.addf %35, %37 : vector<16x128xf32>
    %cst_29 = arith.constant 0.000000e+00 : f32
    %39 = vector.broadcast %cst_29 : f32 to vector<16x128xf32>
    %40 = arith.maximumf %38, %39 : vector<16x128xf32>
    %41 = arith.truncf %40 : vector<16x128xf32> to vector<16x128xbf16>
    %c0_30 = arith.constant 0 : index
    %c0_31 = arith.constant 0 : index
    %42 = vector.load %arg12[%c0_30, %c0_31] : memref<128x784xbf16, #tpu.memory_space<vmem>>, vector<128x784xbf16>
    %cst_32 = arith.constant dense<0.000000e+00> : vector<16x784xf32>
    %43 = tpu.matmul %41, %42, %cst_32 {dimension_numbers = #tpu.dot_dimension_numbers<[1], [0], [0], [1], [0, 0, 1, 1], [], []>} : vector<16x128xbf16>, vector<128x784xbf16>, vector<16x784xf32> -> vector<16x784xf32>
    %c0_33 = arith.constant 0 : index
    %c0_34 = arith.constant 0 : index
    %44 = vector.load %arg13[%c0_33, %c0_34] : memref<1x784xf32, #tpu.memory_space<vmem>>, vector<1x784xf32>
    %45 = vector.broadcast %44 : vector<1x784xf32> to vector<16x784xf32>
    %46 = arith.addf %43, %45 : vector<16x784xf32>
    %47 = arith.negf %46 : vector<16x784xf32>
    %48 = math.exp %47 : vector<16x784xf32>
    %cst_35 = arith.constant 1.000000e+00 : f32
    %49 = vector.broadcast %cst_35 : f32 to vector<16x784xf32>
    %50 = arith.addf %49, %48 : vector<16x784xf32>
    %51 = arith.divf %49, %50 : vector<16x784xf32>
    %c0_36 = arith.constant 0 : index
    %c0_37 = arith.constant 0 : index
    %52 = vector.load %arg14[%c0_36, %c0_37] : memref<16x784xf32, #tpu.memory_space<vmem>>, vector<16x784xf32>
    tpu.vector_store %arg14[%c0_36, %c0_37], %51 {strides = array<i32>} : memref<16x784xf32, #tpu.memory_space<vmem>>, vector<16x784xf32>,
    return
  }
  func.func @transform_0(%arg0: i32) -> (i32, i32) {
    %c0_i32 = arith.constant 0 : i32
    %c0_i32_0 = arith.constant 0 : i32
    return %arg0, %c0_i32 : i32, i32
  }
  func.func @transform_1(%arg0: i32) -> (i32, i32) {
    %c0_i32 = arith.constant 0 : i32
    %c0_i32_0 = arith.constant 0 : i32
    %c0_i32_1 = arith.constant 0 : i32
    return %c0_i32, %c0_i32_0 : i32, i32
  }
  func.func @transform_2(%arg0: i32) -> (i32, i32) {
    %c0_i32 = arith.constant 0 : i32
    %c0_i32_0 = arith.constant 0 : i32
    %c0_i32_1 = arith.constant 0 : i32
    return %c0_i32, %c0_i32_0 : i32, i32
  }
  func.func @transform_3(%arg0: i32) -> (i32, i32) {
    %c0_i32 = arith.constant 0 : i32
    %c0_i32_0 = arith.constant 0 : i32
    %c0_i32_1 = arith.constant 0 : i32
    return %c0_i32, %c0_i32_0 : i32, i32
  }
  func.func @transform_4(%arg0: i32) -> (i32, i32) {
    %c0_i32 = arith.constant 0 : i32
    %c0_i32_0 = arith.constant 0 : i32
    %c0_i32_1 = arith.constant 0 : i32
    return %c0_i32, %c0_i32_0 : i32, i32
  }
  func.func @transform_5(%arg0: i32) -> (i32, i32) {
    %c0_i32 = arith.constant 0 : i32
    %c0_i32_0 = arith.constant 0 : i32
    %c0_i32_1 = arith.constant 0 : i32
    return %c0_i32, %c0_i32_0 : i32, i32
  }
  func.func @transform_6(%arg0: i32) -> (i32, i32) {
    %c0_i32 = arith.constant 0 : i32
    %c0_i32_0 = arith.constant 0 : i32
    %c0_i32_1 = arith.constant 0 : i32
    return %c0_i32, %c0_i32_0 : i32, i32
  }
  func.func @transform_7(%arg0: i32) -> (i32, i32) {
    %c0_i32 = arith.constant 0 : i32
    %c0_i32_0 = arith.constant 0 : i32
    %c0_i32_1 = arith.constant 0 : i32
    return %c0_i32, %c0_i32_0 : i32, i32
  }
  func.func @transform_8(%arg0: i32) -> (i32, i32) {
    %c0_i32 = arith.constant 0 : i32
    %c0_i32_0 = arith.constant 0 : i32
    %c0_i32_1 = arith.constant 0 : i32
    return %c0_i32, %c0_i32_0 : i32, i32
  }
  func.func @transform_9(%arg0: i32) -> (i32, i32) {
    %c0_i32 = arith.constant 0 : i32
    %c0_i32_0 = arith.constant 0 : i32
    %c0_i32_1 = arith.constant 0 : i32
    return %c0_i32, %c0_i32_0 : i32, i32
  }
  func.func @transform_10(%arg0: i32) -> (i32, i32) {
    %c0_i32 = arith.constant 0 : i32
    %c0_i32_0 = arith.constant 0 : i32
    %c0_i32_1 = arith.constant 0 : i32
    return %c0_i32, %c0_i32_0 : i32, i32
  }
  func.func @transform_11(%arg0: i32) -> (i32, i32) {
    %c0_i32 = arith.constant 0 : i32
    %c0_i32_0 = arith.constant 0 : i32
    %c0_i32_1 = arith.constant 0 : i32
    return %c0_i32, %c0_i32_0 : i32, i32
  }
  func.func @transform_12(%arg0: i32) -> (i32, i32) {
    %c0_i32 = arith.constant 0 : i32
    %c0_i32_0 = arith.constant 0 : i32
    %c0_i32_1 = arith.constant 0 : i32
    return %c0_i32, %c0_i32_0 : i32, i32
  }
  func.func @transform_13(%arg0: i32) -> (i32, i32) {
    %c0_i32 = arith.constant 0 : i32
    %c0_i32_0 = arith.constant 0 : i32
    return %arg0, %c0_i32 : i32, i32
  }
}

</mosaic_0001>

<llo_original>
// kernel: tpu_custom_call.1
$region0: #{tpu_custom_call.1}
  #allocation0 [shape = 'u32[]', space=smem, size = 0x4, offset = 0x4, fixed_abs, tag = 'smem constant byte address 0x4 - core index']
  #allocation1 [shape = 'u32[144,128]{1,0:T(1,128)}', space=vmem, size = 0x12000, scoped, tag = 'internal scratch']
  %s0 = inlined_call_operand.vmem [shape: f32[16,784], index: 0, kind: input, shape index: {}]
  %s1 = inlined_call_operand.vmem [shape: bf16[784,128], index: 1, kind: input, shape index: {}]
  %s2 = inlined_call_operand.vmem [shape: f32[1,128], index: 2, kind: input, shape index: {}]
  %s3 = inlined_call_operand.vmem [shape: bf16[128,64], index: 3, kind: input, shape index: {}]
  %s4 = inlined_call_operand.vmem [shape: f32[1,64], index: 4, kind: input, shape index: {}]
  %s5 = inlined_call_operand.vmem [shape: bf16[64,20], index: 5, kind: input, shape index: {}]
  %s6 = inlined_call_operand.vmem [shape: f32[1,20], index: 6, kind: input, shape index: {}]
  %s7 = inlined_call_operand.vmem [shape: bf16[20,64], index: 7, kind: input, shape index: {}]
  %s8 = inlined_call_operand.vmem [shape: f32[1,64], index: 8, kind: input, shape index: {}]
  %s9 = inlined_call_operand.vmem [shape: bf16[64,128], index: 9, kind: input, shape index: {}]
  %s10 = inlined_call_operand.vmem [shape: f32[1,128], index: 10, kind: input, shape index: {}]
  %s11 = inlined_call_operand.vmem [shape: bf16[128,784], index: 11, kind: input, shape index: {}]
  %s12 = inlined_call_operand.vmem [shape: f32[1,784], index: 12, kind: input, shape index: {}]
  %s13 = inlined_call_operand.hbm [shape: f32[16,784], index: 13, kind: output, shape index: {}]
  %s14 = sld [smem:[#allocation0]]
  $region62: #{tpu_custom_call.1} parent=0
    _
  %s16 = ssub.s32 1, %s14
  %s17 = scalar_select 0, %s16, %s14
  $region1: #{tpu_custom_call.1} parent=0
    #allocation2 [shape = 'u8[57344]{0}', space=vmem, size = 0xe000, scoped, tag = 'output window, operand 0, single buffered']
    #allocation3 [shape = 's32[1]{0}', space=sflag, size = 0x4, scoped, tag = 'scoped memory for tpu_custom_call.1']
    %18 = vsyncpa [#allocation3], 0
    // Predicated region
    $region2: #{tpu_custom_call.1} parent=1 // pred_check
      _
    $region3: #{tpu_custom_call.1} parent=1 // pred_check_branch
      %20 = sbr.rel (0) target = $region5
    $region4: #{tpu_custom_call.1} parent=1 // pred_region
      _
    $region5: #{tpu_custom_call.1} parent=1 // pred_fallthru
      _
    // Predicated region
    $region6: #{tpu_custom_call.1} parent=1 // pred_check
      _
    $region7: #{tpu_custom_call.1} parent=1 // pred_check_branch
      %22 = sbr.rel (0) target = $region9
    $region8: #{tpu_custom_call.1} parent=1 // pred_region
      _
    $region9: #{tpu_custom_call.1} parent=1 // pred_fallthru
      _
    // Predicated region
    $region10: #{tpu_custom_call.1} parent=1 // pred_check
      _
    $region11: #{tpu_custom_call.1} parent=1 // pred_check_branch
      %24 = sbr.rel (0) target = $region13
    $region12: #{tpu_custom_call.1} parent=1 // pred_region
      _
    $region13: #{tpu_custom_call.1} parent=1 // pred_fallthru
      _
    // Predicated region
    $region14: #{tpu_custom_call.1} parent=1 // pred_check
      _
    $region15: #{tpu_custom_call.1} parent=1 // pred_check_branch
      %26 = sbr.rel (0) target = $region17
    $region16: #{tpu_custom_call.1} parent=1 // pred_region
      _
    $region17: #{tpu_custom_call.1} parent=1 // pred_fallthru
      _
    // Predicated region
    $region18: #{tpu_custom_call.1} parent=1 // pred_check
      _
    $region19: #{tpu_custom_call.1} parent=1 // pred_check_branch
      %28 = sbr.rel (0) target = $region21
    $region20: #{tpu_custom_call.1} parent=1 // pred_region
      _
    $region21: #{tpu_custom_call.1} parent=1 // pred_fallthru
      _
    // Predicated region
    $region22: #{tpu_custom_call.1} parent=1 // pred_check
      _
    $region23: #{tpu_custom_call.1} parent=1 // pred_check_branch
      %30 = sbr.rel (0) target = $region25
    $region24: #{tpu_custom_call.1} parent=1 // pred_region
      _
    $region25: #{tpu_custom_call.1} parent=1 // pred_fallthru
      _
    // Predicated region
    $region26: #{tpu_custom_call.1} parent=1 // pred_check
      _
    $region27: #{tpu_custom_call.1} parent=1 // pred_check_branch
      %32 = sbr.rel (0) target = $region29
    $region28: #{tpu_custom_call.1} parent=1 // pred_region
      _
    $region29: #{tpu_custom_call.1} parent=1 // pred_fallthru
      _
    // Predicated region
    $region30: #{tpu_custom_call.1} parent=1 // pred_check
      _
    $region31: #{tpu_custom_call.1} parent=1 // pred_check_branch
      %34 = sbr.rel (0) target = $region33
    $region32: #{tpu_custom_call.1} parent=1 // pred_region
      _
    $region33: #{tpu_custom_call.1} parent=1 // pred_fallthru
      _
    // Predicated region
    $region34: #{tpu_custom_call.1} parent=1 // pred_check
      _
    $region35: #{tpu_custom_call.1} parent=1 // pred_check_branch
      %36 = sbr.rel (0) target = $region37
    $region36: #{tpu_custom_call.1} parent=1 // pred_region
      _
    $region37: #{tpu_custom_call.1} parent=1 // pred_fallthru
      _
    // Predicated region
    $region38: #{tpu_custom_call.1} parent=1 // pred_check
      _
    $region39: #{tpu_custom_call.1} parent=1 // pred_check_branch
      %38 = sbr.rel (0) target = $region41
    $region40: #{tpu_custom_call.1} parent=1 // pred_region
      _
    $region41: #{tpu_custom_call.1} parent=1 // pred_fallthru
      _
    // Predicated region
    $region42: #{tpu_custom_call.1} parent=1 // pred_check
      _
    $region43: #{tpu_custom_call.1} parent=1 // pred_check_branch
      %40 = sbr.rel (0) target = $region45
    $region44: #{tpu_custom_call.1} parent=1 // pred_region
      _
    $region45: #{tpu_custom_call.1} parent=1 // pred_fallthru
      _
    // Predicated region
    $region46: #{tpu_custom_call.1} parent=1 // pred_check
      _
    $region47: #{tpu_custom_call.1} parent=1 // pred_check_branch
      %42 = sbr.rel (0) target = $region49
    $region48: #{tpu_custom_call.1} parent=1 // pred_region
      _
    $region49: #{tpu_custom_call.1} parent=1 // pred_fallthru
      _
    // Predicated region
    $region50: #{tpu_custom_call.1} parent=1 // pred_check
      _
    $region51: #{tpu_custom_call.1} parent=1 // pred_check_branch
      %44 = sbr.rel (0) target = $region53
    $region52: #{tpu_custom_call.1} parent=1 // pred_region
      _
    $region53: #{tpu_custom_call.1} parent=1 // pred_fallthru
      _
    %v46 = vld [vmem:[%s0] sm:$0xff]
    %v47 = vld [vmem:[%s0 + $0x8] sm:$0xff]
    %v48 = vld [vmem:[%s0 + $0x10] sm:$0xff]
    %v49 = vld [vmem:[%s0 + $0x18] sm:$0xff]
    %v50 = vld [vmem:[%s0 + $0x20] sm:$0xff]
    %v51 = vld [vmem:[%s0 + $0x28] sm:$0xff]
    %v52 = vld [vmem:[%s0 + $0x30] sm:$0xff]
    %v53 = vld [vmem:[%s0 + $0x38] sm:$0xff]
    %v54 = vld [vmem:[%s0 + $0x40] sm:$0xff]
    %v55 = vld [vmem:[%s0 + $0x48] sm:$0xff]
    %v56 = vld [vmem:[%s0 + $0x50] sm:$0xff]
    %v57 = vld [vmem:[%s0 + $0x58] sm:$0xff]
    %v58 = vld [vmem:[%s0 + $0x60] sm:$0xff]
    %v59 = vld [vmem:[%s0 + $0x68] sm:$0xff]
    %v60 = vpack.c.bf16 %v53, %v46
    %v61 = vpack.c.bf16 %v54, %v47
    %v62 = vpack.c.bf16 %v55, %v48
    %v63 = vpack.c.bf16 %v56, %v49
    %v64 = vpack.c.bf16 %v57, %v50
    %v65 = vpack.c.bf16 %v58, %v51
    %v66 = vpack.c.bf16 %v59, %v52
    %v67 = vld [vmem:[%s1] sm:$0xf]
    %v68 = vld [vmem:[%s1 + $0x4] sm:$0xf]
    %v69 = vld [vmem:[%s1 + $0x8] sm:$0xf]
    %v70 = vld [vmem:[%s1 + $0xc] sm:$0xf]
    %v71 = vld [vmem:[%s1 + $0x10] sm:$0xf]
    %v72 = vld [vmem:[%s1 + $0x14] sm:$0xf]
    %v73 = vld [vmem:[%s1 + $0x18] sm:$0xf]
    %v74 = vld [vmem:[%s1 + $0x1c] sm:$0xf]
    %v75 = vld [vmem:[%s1 + $0x20] sm:$0xf]
    %v76 = vld [vmem:[%s1 + $0x24] sm:$0xf]
    %v77 = vld [vmem:[%s1 + $0x28] sm:$0xf]
    %v78 = vld [vmem:[%s1 + $0x2c] sm:$0xf]
    %v79 = vld [vmem:[%s1 + $0x30] sm:$0xf]
    %v80 = vld [vmem:[%s1 + $0x34] sm:$0xf]
    %v81 = vld [vmem:[%s1 + $0x38] sm:$0xf]
    %v82 = vld [vmem:[%s1 + $0x3c] sm:$0xf]
    %v83 = vld [vmem:[%s1 + $0x40] sm:$0xf]
    %v84 = vld [vmem:[%s1 + $0x44] sm:$0xf]
    %v85 = vld [vmem:[%s1 + $0x48] sm:$0xf]
    %v86 = vld [vmem:[%s1 + $0x4c] sm:$0xf]
    %v87 = vld [vmem:[%s1 + $0x50] sm:$0xf]
    %v88 = vld [vmem:[%s1 + $0x54] sm:$0xf]
    %v89 = vld [vmem:[%s1 + $0x58] sm:$0xf]
    %v90 = vld [vmem:[%s1 + $0x5c] sm:$0xf]
    %v91 = vld [vmem:[%s1 + $0x60] sm:$0xf]
    %v92 = vld [vmem:[%s1 + $0x64] sm:$0xf]
    %v93 = vld [vmem:[%s1 + $0x68] sm:$0xf]
    %v94 = vld [vmem:[%s1 + $0x6c] sm:$0xf]
    %v95 = vld [vmem:[%s1 + $0x70] sm:$0xf]
    %v96 = vld [vmem:[%s1 + $0x74] sm:$0xf]
    %v97 = vld [vmem:[%s1 + $0x78] sm:$0xf]
    %v98 = vld [vmem:[%s1 + $0x7c] sm:$0xf]
    %v99 = vld [vmem:[%s1 + $0x80] sm:$0xf]
    %v100 = vld [vmem:[%s1 + $0x84] sm:$0xf]
    %v101 = vld [vmem:[%s1 + $0x88] sm:$0xf]
    %v102 = vld [vmem:[%s1 + $0x8c] sm:$0xf]
    %v103 = vld [vmem:[%s1 + $0x90] sm:$0xf]
    %v104 = vld [vmem:[%s1 + $0x94] sm:$0xf]
    %v105 = vld [vmem:[%s1 + $0x98] sm:$0xf]
    %v106 = vld [vmem:[%s1 + $0x9c] sm:$0xf]
    %v107 = vld [vmem:[%s1 + $0xa0] sm:$0xf]
    %v108 = vld [vmem:[%s1 + $0xa4] sm:$0xf]
    %v109 = vld [vmem:[%s1 + $0xa8] sm:$0xf]
    %v110 = vld [vmem:[%s1 + $0xac] sm:$0xf]
    %v111 = vld [vmem:[%s1 + $0xb0] sm:$0xf]
    %v112 = vld [vmem:[%s1 + $0xb4] sm:$0xf]
    %v113 = vld [vmem:[%s1 + $0xb8] sm:$0xf]
    %v114 = vld [vmem:[%s1 + $0xbc] sm:$0xf]
    %v115 = vld [vmem:[%s1 + $0xc0] sm:$0xf]
    %v116 = vld [vmem:[%s1 + $0xc4] sm:$0xf]
    %v117 = vld [vmem:[%s1 + $0xc8] sm:$0xf]
    %v118 = vld [vmem:[%s1 + $0xcc] sm:$0xf]
    %v119 = vld [vmem:[%s1 + $0xd0] sm:$0xf]
    %v120 = vld [vmem:[%s1 + $0xd4] sm:$0xf]
    %v121 = vld [vmem:[%s1 + $0xd8] sm:$0xf]
    %v122 = vld [vmem:[%s1 + $0xdc] sm:$0xf]
    %v123 = vld [vmem:[%s1 + $0xe0] sm:$0xf]
    %v124 = vld [vmem:[%s1 + $0xe4] sm:$0xf]
    %v125 = vld [vmem:[%s1 + $0xe8] sm:$0xf]
    %v126 = vld [vmem:[%s1 + $0xec] sm:$0xf]
    %v127 = vld [vmem:[%s1 + $0xf0] sm:$0xf]
    %v128 = vld [vmem:[%s1 + $0xf4] sm:$0xf]
    %v129 = vld [vmem:[%s1 + $0xf8] sm:$0xf]
    %v130 = vld [vmem:[%s1 + $0xfc] sm:$0xf]
    %v131 = vld [vmem:[%s1 + $0x100] sm:$0xf]
    %v132 = vld [vmem:[%s1 + $0x104] sm:$0xf]
    %v133 = vld [vmem:[%s1 + $0x108] sm:$0xf]
    %v134 = vld [vmem:[%s1 + $0x10c] sm:$0xf]
    %v135 = vld [vmem:[%s1 + $0x110] sm:$0xf]
    %v136 = vld [vmem:[%s1 + $0x114] sm:$0xf]
    %v137 = vld [vmem:[%s1 + $0x118] sm:$0xf]
    %v138 = vld [vmem:[%s1 + $0x11c] sm:$0xf]
    %v139 = vld [vmem:[%s1 + $0x120] sm:$0xf]
    %v140 = vld [vmem:[%s1 + $0x124] sm:$0xf]
    %v141 = vld [vmem:[%s1 + $0x128] sm:$0xf]
    %v142 = vld [vmem:[%s1 + $0x12c] sm:$0xf]
    %v143 = vld [vmem:[%s1 + $0x130] sm:$0xf]
    %v144 = vld [vmem:[%s1 + $0x134] sm:$0xf]
    %v145 = vld [vmem:[%s1 + $0x138] sm:$0xf]
    %v146 = vld [vmem:[%s1 + $0x13c] sm:$0xf]
    %v147 = vld [vmem:[%s1 + $0x140] sm:$0xf]
    %v148 = vld [vmem:[%s1 + $0x144] sm:$0xf]
    %v149 = vld [vmem:[%s1 + $0x148] sm:$0xf]
    %v150 = vld [vmem:[%s1 + $0x14c] sm:$0xf]
    %v151 = vld [vmem:[%s1 + $0x150] sm:$0xf]
    %v152 = vld [vmem:[%s1 + $0x154] sm:$0xf]
    %v153 = vld [vmem:[%s1 + $0x158] sm:$0xf]
    %v154 = vld [vmem:[%s1 + $0x15c] sm:$0xf]
    %v155 = vld [vmem:[%s1 + $0x160] sm:$0xf]
    %v156 = vld [vmem:[%s1 + $0x164] sm:$0xf]
    %v157 = vld [vmem:[%s1 + $0x168] sm:$0xf]
    %v158 = vld [vmem:[%s1 + $0x16c] sm:$0xf]
    %v159 = vld [vmem:[%s1 + $0x170] sm:$0xf]
    %v160 = vld [vmem:[%s1 + $0x174] sm:$0xf]
    %v161 = vld [vmem:[%s1 + $0x178] sm:$0xf]
    %v162 = vld [vmem:[%s1 + $0x17c] sm:$0xf]
    %v163 = vld [vmem:[%s1 + $0x180] sm:$0xf]
    %v164 = vld [vmem:[%s1 + $0x184] sm:$0xf]
    %v165 = vld [vmem:[%s2] sm:$0x1]
    %v167 = vlaneseq
    %v168 = vshrl.u32 %v167, 7
    %v169 = vsub.s32 0, %v168
    %v170 = vrot.slane %v165, %v169
    %v270 = vunpack.c.l.b16 %v67
    %v271 = vunpack.c.l.b16 %v68
    %v272 = vunpack.c.l.b16 %v69
    %v273 = vunpack.c.l.b16 %v70
    %v274 = vunpack.c.l.b16 %v71
    %v275 = vunpack.c.l.b16 %v72
    %v276 = vunpack.c.l.b16 %v73
    %v277 = vunpack.c.l.b16 %v74
    %v278 = vunpack.c.l.b16 %v75
    %v279 = vunpack.c.l.b16 %v76
    %v280 = vunpack.c.l.b16 %v77
    %v281 = vunpack.c.l.b16 %v78
    %v282 = vunpack.c.l.b16 %v79
    %v283 = vunpack.c.l.b16 %v80
    %v284 = vunpack.c.l.b16 %v81
    %v285 = vunpack.c.l.b16 %v82
    %v286 = vunpack.c.l.b16 %v83
    %v287 = vunpack.c.l.b16 %v84
    %v288 = vunpack.c.l.b16 %v85
    %v289 = vunpack.c.l.b16 %v86
    %v290 = vunpack.c.l.b16 %v87
    %v291 = vunpack.c.l.b16 %v88
    %v292 = vunpack.c.l.b16 %v89
    %v293 = vunpack.c.l.b16 %v90
    %v294 = vunpack.c.l.b16 %v91
    %v295 = vunpack.c.l.b16 %v92
    %v296 = vunpack.c.l.b16 %v93
    %v297 = vunpack.c.l.b16 %v94
    %v298 = vunpack.c.l.b16 %v95
    %v299 = vunpack.c.l.b16 %v96
    %v300 = vunpack.c.l.b16 %v97
    %v301 = vunpack.c.l.b16 %v98
    %v302 = vunpack.c.l.b16 %v99
    %v303 = vunpack.c.l.b16 %v100
    %v304 = vunpack.c.l.b16 %v101
    %v305 = vunpack.c.l.b16 %v102
    %v306 = vunpack.c.l.b16 %v103
    %v307 = vunpack.c.l.b16 %v104
    %v308 = vunpack.c.l.b16 %v105
    %v309 = vunpack.c.l.b16 %v106
    %v310 = vunpack.c.l.b16 %v107
    %v311 = vunpack.c.l.b16 %v108
    %v312 = vunpack.c.l.b16 %v109
    %v313 = vunpack.c.l.b16 %v110
    %v314 = vunpack.c.l.b16 %v111
    %v315 = vunpack.c.l.b16 %v112
    %v316 = vunpack.c.l.b16 %v113
    %v317 = vunpack.c.l.b16 %v114
    %v318 = vunpack.c.l.b16 %v115
    %v319 = vunpack.c.l.b16 %v116
    %v320 = vunpack.c.l.b16 %v117
    %v321 = vunpack.c.l.b16 %v118
    %v322 = vunpack.c.l.b16 %v119
    %v323 = vunpack.c.l.b16 %v120
    %v324 = vunpack.c.l.b16 %v121
    %v325 = vunpack.c.l.b16 %v122
    %v326 = vunpack.c.l.b16 %v123
    %v327 = vunpack.c.l.b16 %v124
    %v328 = vunpack.c.l.b16 %v125
    %v329 = vunpack.c.l.b16 %v126
    %v330 = vunpack.c.l.b16 %v127
    %v331 = vunpack.c.l.b16 %v128
    %v332 = vunpack.c.l.b16 %v129
    %v333 = vunpack.c.l.b16 %v130
    %v334 = vunpack.c.l.b16 %v131
    %v335 = vunpack.c.l.b16 %v132
    %v336 = vunpack.c.l.b16 %v133
    %v337 = vunpack.c.l.b16 %v134
    %v338 = vunpack.c.l.b16 %v135
    %v339 = vunpack.c.l.b16 %v136
    %v340 = vunpack.c.l.b16 %v137
    %v341 = vunpack.c.l.b16 %v138
    %v342 = vunpack.c.l.b16 %v139
    %v343 = vunpack.c.l.b16 %v140
    %v344 = vunpack.c.l.b16 %v141
    %v345 = vunpack.c.l.b16 %v142
    %v346 = vunpack.c.l.b16 %v143
    %v347 = vunpack.c.l.b16 %v144
    %v348 = vunpack.c.l.b16 %v145
    %v349 = vunpack.c.l.b16 %v146
    %v350 = vunpack.c.l.b16 %v147
    %v351 = vunpack.c.l.b16 %v148
    %v352 = vunpack.c.l.b16 %v149
    %v353 = vunpack.c.l.b16 %v150
    %v354 = vunpack.c.l.b16 %v151
    %v355 = vunpack.c.l.b16 %v152
    %v356 = vunpack.c.l.b16 %v153
    %v357 = vunpack.c.l.b16 %v154
    %v358 = vunpack.c.l.b16 %v155
    %v359 = vunpack.c.l.b16 %v156
    %v360 = vunpack.c.l.b16 %v157
    %v361 = vunpack.c.l.b16 %v158
    %v362 = vunpack.c.l.b16 %v159
    %v363 = vunpack.c.l.b16 %v160
    %v364 = vunpack.c.l.b16 %v161
    %v365 = vunpack.c.l.b16 %v162
    %v366 = vunpack.c.l.b16 %v163
    %v367 = vunpack.c.l.b16 %v164
    %v368 = vpack.c.b16 %v271, %v270
    %v369 = vpack.c.b16 %v273, %v272
    %v370 = vpack.c.b16 %v275, %v274
    %v371 = vpack.c.b16 %v277, %v276
    %v372 = vpack.c.b16 %v279, %v278
    %v373 = vpack.c.b16 %v281, %v280
    %v374 = vpack.c.b16 %v283, %v282
    %v375 = vpack.c.b16 %v285, %v284
    %v376 = vpack.c.b16 %v287, %v286
    %v377 = vpack.c.b16 %v289, %v288
    %v378 = vpack.c.b16 %v291, %v290
    %v379 = vpack.c.b16 %v293, %v292
    %v380 = vpack.c.b16 %v295, %v294
    %v381 = vpack.c.b16 %v297, %v296
    %v382 = vpack.c.b16 %v299, %v298
    %v383 = vpack.c.b16 %v301, %v300
    %v384 = vpack.c.b16 %v303, %v302
    %v385 = vpack.c.b16 %v305, %v304
    %v386 = vpack.c.b16 %v307, %v306
    %v387 = vpack.c.b16 %v309, %v308
    %v388 = vpack.c.b16 %v311, %v310
    %v389 = vpack.c.b16 %v313, %v312
    %v390 = vpack.c.b16 %v315, %v314
    %v391 = vpack.c.b16 %v317, %v316
    %v392 = vpack.c.b16 %v319, %v318
    %v393 = vpack.c.b16 %v321, %v320
    %v394 = vpack.c.b16 %v323, %v322
    %v395 = vpack.c.b16 %v325, %v324
    %v396 = vpack.c.b16 %v327, %v326
    %v397 = vpack.c.b16 %v329, %v328
    %v398 = vpack.c.b16 %v331, %v330
    %v399 = vpack.c.b16 %v333, %v332
    %v400 = vpack.c.b16 %v335, %v334
    %v401 = vpack.c.b16 %v337, %v336
    %v402 = vpack.c.b16 %v339, %v338
    %v403 = vpack.c.b16 %v341, %v340
    %v404 = vpack.c.b16 %v343, %v342
    %v405 = vpack.c.b16 %v345, %v344
    %v406 = vpack.c.b16 %v347, %v346
    %v407 = vpack.c.b16 %v349, %v348
    %v408 = vpack.c.b16 %v351, %v350
    %v409 = vpack.c.b16 %v353, %v352
    %v410 = vpack.c.b16 %v355, %v354
    %v411 = vpack.c.b16 %v357, %v356
    %v412 = vpack.c.b16 %v359, %v358
    %v413 = vpack.c.b16 %v361, %v360
    %v414 = vpack.c.b16 %v363, %v362
    %v415 = vpack.c.b16 %v365, %v364
    %v416 = vpack.c.b16 %v367, %v366
    %vm466 = vcmask 130048
    %v468 = vsel %vm466, %v66, 0
    %470 = vmatprep.subr.bf16.mxu0 0
    %471 = vmatpush1.bf16.msra.mxu0 %v375
    %472 = vmatprep.subr.bf16.mxu0 0
    %473 = vmatpush1.bf16.msra.mxu0 %v374
    %474 = vmatprep.subr.bf16.mxu0 0
    %475 = vmatpush1.bf16.msra.mxu0 %v373
    %476 = vmatprep.subr.bf16.mxu0 0
    %477 = vmatpush1.bf16.msra.mxu0 %v372
    %478 = vmatprep.subr.bf16.mxu0 0
    %479 = vmatpush1.bf16.msra.mxu0 %v371
    %480 = vmatprep.subr.bf16.mxu0 0
    %481 = vmatpush1.bf16.msra.mxu0 %v370
    %482 = vmatprep.subr.bf16.mxu0 0
    %483 = vmatpush1.bf16.msra.mxu0 %v369
    %484 = vmatprep.subr.bf16.mxu0 0
    %485 = vmatpush1.bf16.msra.mxu0 %v368
    %486 = vmatprep.subr.bf16.mxu0 0
    %487 = vmatpush2.bf16.msra.mxu0 %v383
    %488 = vmatprep.subr.bf16.mxu0 0
    %489 = vmatpush2.bf16.msra.mxu0 %v382
    %490 = vmatprep.subr.bf16.mxu0 0
    %491 = vmatpush2.bf16.msra.mxu0 %v381
    %492 = vmatprep.subr.bf16.mxu0 0
    %493 = vmatpush2.bf16.msra.mxu0 %v380
    %494 = vmatprep.subr.bf16.mxu0 0
    %495 = vmatpush2.bf16.msra.mxu0 %v379
    %496 = vmatprep.subr.bf16.mxu0 0
    %497 = vmatpush2.bf16.msra.mxu0 %v378
    %498 = vmatprep.subr.bf16.mxu0 0
    %499 = vmatpush2.bf16.msra.mxu0 %v377
    %500 = vmatprep.subr.bf16.mxu0 0
    %501 = vmatpush2.bf16.msra.mxu0 %v376
    %502 = vmatprep.mubr.bf16.mxu0 %v61
    %503 = vmatmul.mubr.bf16.gmra.mxu0 %v60
    %v504 = vpop.f32.mrf.mxu0
    %v505 = vadd.f32 %v170, %v504
    %v506 = vpop.f32.mrf.mxu0
    %v507 = vpop.f32.mrf.mxu0
    %v508 = vadd.f32 %v170, %v507
    %v509 = vpop.f32.mrf.mxu0
    %510 = vdwg.mxu0
    %511 = vmatprep.subr.bf16.mxu0 0
    %512 = vmatpush1.bf16.msra.mxu0 %v391
    %513 = vmatprep.subr.bf16.mxu0 0
    %514 = vmatpush1.bf16.msra.mxu0 %v390
    %515 = vmatprep.subr.bf16.mxu0 0
    %516 = vmatpush1.bf16.msra.mxu0 %v389
    %517 = vmatprep.subr.bf16.mxu0 0
    %518 = vmatpush1.bf16.msra.mxu0 %v388
    %519 = vmatprep.subr.bf16.mxu0 0
    %520 = vmatpush1.bf16.msra.mxu0 %v387
    %521 = vmatprep.subr.bf16.mxu0 0
    %522 = vmatpush1.bf16.msra.mxu0 %v386
    %523 = vmatprep.subr.bf16.mxu0 0
    %524 = vmatpush1.bf16.msra.mxu0 %v385
    %525 = vmatprep.subr.bf16.mxu0 0
    %526 = vmatpush1.bf16.msra.mxu0 %v384
    %527 = vmatprep.subr.bf16.mxu0 0
    %528 = vmatpush2.bf16.msra.mxu0 %v399
    %529 = vmatprep.subr.bf16.mxu0 0
    %530 = vmatpush2.bf16.msra.mxu0 %v398
    %531 = vmatprep.subr.bf16.mxu0 0
    %532 = vmatpush2.bf16.msra.mxu0 %v397
    %533 = vmatprep.subr.bf16.mxu0 0
    %534 = vmatpush2.bf16.msra.mxu0 %v396
    %535 = vmatprep.subr.bf16.mxu0 0
    %536 = vmatpush2.bf16.msra.mxu0 %v395
    %537 = vmatprep.subr.bf16.mxu0 0
    %538 = vmatpush2.bf16.msra.mxu0 %v394
    %539 = vmatprep.subr.bf16.mxu0 0
    %540 = vmatpush2.bf16.msra.mxu0 %v393
    %541 = vmatprep.subr.bf16.mxu0 0
    %542 = vmatpush2.bf16.msra.mxu0 %v392
    %543 = vmatprep.mubr.bf16.mxu0 %v63
    %544 = vmatmul.mubr.bf16.gmra.mxu0 %v62
    %v545 = vpop.f32.mrf.mxu0
    %v546 = vadd.f32 %v505, %v545
    %v547 = vpop.f32.mrf.mxu0
    %v548 = vpop.f32.mrf.mxu0
    %v549 = vadd.f32 %v508, %v548
    %v550 = vpop.f32.mrf.mxu0
    %551 = vdwg.mxu0
    %552 = vmatprep.subr.bf16.mxu0 0
    %553 = vmatpush1.bf16.msra.mxu0 %v407
    %554 = vmatprep.subr.bf16.mxu0 0
    %555 = vmatpush1.bf16.msra.mxu0 %v406
    %556 = vmatprep.subr.bf16.mxu0 0
    %557 = vmatpush1.bf16.msra.mxu0 %v405
    %558 = vmatprep.subr.bf16.mxu0 0
    %559 = vmatpush1.bf16.msra.mxu0 %v404
    %560 = vmatprep.subr.bf16.mxu0 0
    %561 = vmatpush1.bf16.msra.mxu0 %v403
    %562 = vmatprep.subr.bf16.mxu0 0
    %563 = vmatpush1.bf16.msra.mxu0 %v402
    %564 = vmatprep.subr.bf16.mxu0 0
    %565 = vmatpush1.bf16.msra.mxu0 %v401
    %566 = vmatprep.subr.bf16.mxu0 0
    %567 = vmatpush1.bf16.msra.mxu0 %v400
    %568 = vmatprep.subr.bf16.mxu0 0
    %569 = vmatpush2.bf16.msra.mxu0 %v415
    %570 = vmatprep.subr.bf16.mxu0 0
    %571 = vmatpush2.bf16.msra.mxu0 %v414
    %572 = vmatprep.subr.bf16.mxu0 0
    %573 = vmatpush2.bf16.msra.mxu0 %v413
    %574 = vmatprep.subr.bf16.mxu0 0
    %575 = vmatpush2.bf16.msra.mxu0 %v412
    %576 = vmatprep.subr.bf16.mxu0 0
    %577 = vmatpush2.bf16.msra.mxu0 %v411
    %578 = vmatprep.subr.bf16.mxu0 0
    %579 = vmatpush2.bf16.msra.mxu0 %v410
    %580 = vmatprep.subr.bf16.mxu0 0
    %581 = vmatpush2.bf16.msra.mxu0 %v409
    %582 = vmatprep.subr.bf16.mxu0 0
    %583 = vmatpush2.bf16.msra.mxu0 %v408
    %584 = vmatprep.mubr.bf16.mxu0 %v65
    %585 = vmatmul.mubr.bf16.gmra.mxu0 %v64
    %v586 = vpop.f32.mrf.mxu0
    %v587 = vadd.f32 %v546, %v586
    %v588 = vpop.f32.mrf.mxu0
    %v589 = vpop.f32.mrf.mxu0
    %v590 = vadd.f32 %v549, %v589
    %v591 = vpop.f32.mrf.mxu0
    %592 = vdwg.mxu0
    %593 = vmatprep.subr.bf16.mxu0 0
    %594 = vmatpush1.bf16.msra.mxu0 0
    %595 = vmatprep.subr.bf16.mxu0 0
    %596 = vmatpush1.bf16.msra.mxu0 0
    %597 = vmatprep.subr.bf16.mxu0 0
    %598 = vmatpush1.bf16.msra.mxu0 0
    %599 = vmatprep.subr.bf16.mxu0 0
    %600 = vmatpush1.bf16.msra.mxu0 0
    %601 = vmatprep.subr.bf16.mxu0 0
    %602 = vmatpush1.bf16.msra.mxu0 0
    %603 = vmatprep.subr.bf16.mxu0 0
    %604 = vmatpush1.bf16.msra.mxu0 0
    %605 = vmatprep.subr.bf16.mxu0 0
    %606 = vmatpush1.bf16.msra.mxu0 0
    %607 = vmatprep.subr.bf16.mxu0 0
    %608 = vmatpush1.bf16.msra.mxu0 %v416
    %609 = vmatprep.subr.bf16.mxu0 0
    %610 = vmatpush2.bf16.msra.mxu0 0
    %611 = vmatprep.subr.bf16.mxu0 0
    %612 = vmatpush2.bf16.msra.mxu0 0
    %613 = vmatprep.subr.bf16.mxu0 0
    %614 = vmatpush2.bf16.msra.mxu0 0
    %615 = vmatprep.subr.bf16.mxu0 0
    %616 = vmatpush2.bf16.msra.mxu0 0
    %617 = vmatprep.subr.bf16.mxu0 0
    %618 = vmatpush2.bf16.msra.mxu0 0
    %619 = vmatprep.subr.bf16.mxu0 0
    %620 = vmatpush2.bf16.msra.mxu0 0
    %621 = vmatprep.subr.bf16.mxu0 0
    %622 = vmatpush2.bf16.msra.mxu0 0
    %623 = vmatprep.subr.bf16.mxu0 0
    %624 = vmatpush2.bf16.msra.mxu0 0
    %625 = vmatprep.mubr.bf16.mxu0 0
    %626 = vmatmul.mubr.bf16.gmra.mxu0 %v468
    %v627 = vpop.f32.mrf.mxu0
    %v628 = vadd.f32 %v587, %v627
    %v629 = vpop.f32.mrf.mxu0
    %v630 = vpop.f32.mrf.mxu0
    %v631 = vadd.f32 %v590, %v630
    %v632 = vpop.f32.mrf.mxu0
    %633 = vdwg.mxu0
    %v634 = vmax.f32 %v628, 0.0
    %v635 = vmax.f32 %v631, 0.0
    %v636 = vpack.c.bf16 %v635, %v634
    %v637 = vld [vmem:[%s3] sm:$0xf]
    %v638 = vld [vmem:[%s3 + $0x4] sm:$0xf]
    %v639 = vld [vmem:[%s3 + $0x8] sm:$0xf]
    %v640 = vld [vmem:[%s3 + $0xc] sm:$0xf]
    %v641 = vld [vmem:[%s3 + $0x10] sm:$0xf]
    %v642 = vld [vmem:[%s3 + $0x14] sm:$0xf]
    %v643 = vld [vmem:[%s3 + $0x18] sm:$0xf]
    %v644 = vld [vmem:[%s3 + $0x1c] sm:$0xf]
    %v645 = vld [vmem:[%s3 + $0x20] sm:$0xf]
    %v646 = vld [vmem:[%s3 + $0x24] sm:$0xf]
    %v647 = vld [vmem:[%s3 + $0x28] sm:$0xf]
    %v648 = vld [vmem:[%s3 + $0x2c] sm:$0xf]
    %v649 = vld [vmem:[%s3 + $0x30] sm:$0xf]
    %v650 = vld [vmem:[%s3 + $0x34] sm:$0xf]
    %v651 = vld [vmem:[%s3 + $0x38] sm:$0xf]
    %v652 = vld [vmem:[%s3 + $0x3c] sm:$0xf]
    %v653 = vld [vmem:[%s4] sm:$0x1]
    %v655 = vlaneseq
    %v656 = vshrl.u32 %v655, 7
    %v657 = vsub.s32 0, %v656
    %v658 = vrot.slane %v653, %v657
    %v676 = vunpack.c.l.b16 %v637
    %v677 = vunpack.c.l.b16 %v638
    %v678 = vunpack.c.l.b16 %v639
    %v679 = vunpack.c.l.b16 %v640
    %v680 = vunpack.c.l.b16 %v641
    %v681 = vunpack.c.l.b16 %v642
    %v682 = vunpack.c.l.b16 %v643
    %v683 = vunpack.c.l.b16 %v644
    %v684 = vunpack.c.l.b16 %v645
    %v685 = vunpack.c.l.b16 %v646
    %v686 = vunpack.c.l.b16 %v647
    %v687 = vunpack.c.l.b16 %v648
    %v688 = vunpack.c.l.b16 %v649
    %v689 = vunpack.c.l.b16 %v650
    %v690 = vunpack.c.l.b16 %v651
    %v691 = vunpack.c.l.b16 %v652
    %v692 = vpack.c.b16 %v677, %v676
    %v693 = vpack.c.b16 %v679, %v678
    %v694 = vpack.c.b16 %v681, %v680
    %v695 = vpack.c.b16 %v683, %v682
    %v696 = vpack.c.b16 %v685, %v684
    %v697 = vpack.c.b16 %v687, %v686
    %v698 = vpack.c.b16 %v689, %v688
    %v699 = vpack.c.b16 %v691, %v690
    %708 = vmatprep.subr.bf16.mxu0 0
    %709 = vmatpush1.bf16.msra.mxu0 %v699
    %710 = vmatprep.subr.bf16.mxu0 0
    %711 = vmatpush1.bf16.msra.mxu0 %v698
    %712 = vmatprep.subr.bf16.mxu0 0
    %713 = vmatpush1.bf16.msra.mxu0 %v697
    %714 = vmatprep.subr.bf16.mxu0 0
    %715 = vmatpush1.bf16.msra.mxu0 %v696
    %716 = vmatprep.subr.bf16.mxu0 0
    %717 = vmatpush1.bf16.msra.mxu0 %v695
    %718 = vmatprep.subr.bf16.mxu0 0
    %719 = vmatpush1.bf16.msra.mxu0 %v694
    %720 = vmatprep.subr.bf16.mxu0 0
    %721 = vmatpush1.bf16.msra.mxu0 %v693
    %722 = vmatprep.subr.bf16.mxu0 0
    %723 = vmatpush1.bf16.msra.mxu0 %v692
    %724 = vmatprep.subr.bf16.mxu0 0
    %725 = vmatpush2.bf16.msra.mxu0 0
    %726 = vmatprep.subr.bf16.mxu0 0
    %727 = vmatpush2.bf16.msra.mxu0 0
    %728 = vmatprep.subr.bf16.mxu0 0
    %729 = vmatpush2.bf16.msra.mxu0 0
    %730 = vmatprep.subr.bf16.mxu0 0
    %731 = vmatpush2.bf16.msra.mxu0 0
    %732 = vmatprep.subr.bf16.mxu0 0
    %733 = vmatpush2.bf16.msra.mxu0 0
    %734 = vmatprep.subr.bf16.mxu0 0
    %735 = vmatpush2.bf16.msra.mxu0 0
    %736 = vmatprep.subr.bf16.mxu0 0
    %737 = vmatpush2.bf16.msra.mxu0 0
    %738 = vmatprep.subr.bf16.mxu0 0
    %739 = vmatpush2.bf16.msra.mxu0 0
    %740 = vmatprep.mubr.bf16.mxu0 0
    %741 = vmatmul.mubr.bf16.gmra.mxu0 %v636
    %v742 = vpop.f32.mrf.mxu0
    %v743 = vadd.f32 %v658, %v742
    %v744 = vpop.f32.mrf.mxu0
    %v745 = vpop.f32.mrf.mxu0
    %v746 = vadd.f32 %v658, %v745
    %v747 = vpop.f32.mrf.mxu0
    %748 = vdwg.mxu0
    %v749 = vmax.f32 %v743, 0.0
    %v750 = vmax.f32 %v746, 0.0
    %v751 = vpack.c.bf16 %v750, %v749
    %v752 = vld [vmem:[%s5] sm:$0xf]
    %v753 = vld [vmem:[%s5 + $0x4] sm:$0xf]
    %v754 = vld [vmem:[%s5 + $0x8] sm:$0xf]
    %v755 = vld [vmem:[%s5 + $0xc] sm:$0xf]
    %v756 = vld [vmem:[%s5 + $0x10] sm:$0xf]
    %v757 = vld [vmem:[%s5 + $0x14] sm:$0xf]
    %v758 = vld [vmem:[%s5 + $0x18] sm:$0xf]
    %v759 = vld [vmem:[%s5 + $0x1c] sm:$0xf]
    %v760 = vld [vmem:[%s6] sm:$0x1]
    %v762 = vlaneseq
    %v763 = vshrl.u32 %v762, 7
    %v764 = vsub.s32 0, %v763
    %v765 = vrot.slane %v760, %v764
    %v775 = vunpack.c.l.b16 %v752
    %v776 = vunpack.c.l.b16 %v753
    %v777 = vunpack.c.l.b16 %v754
    %v778 = vunpack.c.l.b16 %v755
    %v779 = vunpack.c.l.b16 %v756
    %v780 = vunpack.c.l.b16 %v757
    %v781 = vunpack.c.l.b16 %v758
    %v782 = vunpack.c.l.b16 %v759
    %v783 = vpack.c.b16 %v776, %v775
    %v784 = vpack.c.b16 %v778, %v777
    %v785 = vpack.c.b16 %v780, %v779
    %v786 = vpack.c.b16 %v782, %v781
    %vm791 = vcmask 523264
    %v793 = vsel %vm791, %v751, 0
    %795 = vmatprep.subr.bf16.mxu0 0
    %796 = vmatpush1.bf16.msra.mxu0 0
    %797 = vmatprep.subr.bf16.mxu0 0
    %798 = vmatpush1.bf16.msra.mxu0 0
    %799 = vmatprep.subr.bf16.mxu0 0
    %800 = vmatpush1.bf16.msra.mxu0 0
    %801 = vmatprep.subr.bf16.mxu0 0
    %802 = vmatpush1.bf16.msra.mxu0 0
    %803 = vmatprep.subr.bf16.mxu0 0
    %804 = vmatpush1.bf16.msra.mxu0 %v786
    %805 = vmatprep.subr.bf16.mxu0 0
    %806 = vmatpush1.bf16.msra.mxu0 %v785
    %807 = vmatprep.subr.bf16.mxu0 0
    %808 = vmatpush1.bf16.msra.mxu0 %v784
    %809 = vmatprep.subr.bf16.mxu0 0
    %810 = vmatpush1.bf16.msra.mxu0 %v783
    %811 = vmatprep.subr.bf16.mxu0 0
    %812 = vmatpush2.bf16.msra.mxu0 0
    %813 = vmatprep.subr.bf16.mxu0 0
    %814 = vmatpush2.bf16.msra.mxu0 0
    %815 = vmatprep.subr.bf16.mxu0 0
    %816 = vmatpush2.bf16.msra.mxu0 0
    %817 = vmatprep.subr.bf16.mxu0 0
    %818 = vmatpush2.bf16.msra.mxu0 0
    %819 = vmatprep.subr.bf16.mxu0 0
    %820 = vmatpush2.bf16.msra.mxu0 0
    %821 = vmatprep.subr.bf16.mxu0 0
    %822 = vmatpush2.bf16.msra.mxu0 0
    %823 = vmatprep.subr.bf16.mxu0 0
    %824 = vmatpush2.bf16.msra.mxu0 0
    %825 = vmatprep.subr.bf16.mxu0 0
    %826 = vmatpush2.bf16.msra.mxu0 0
    %827 = vmatprep.mubr.bf16.mxu0 0
    %828 = vmatmul.mubr.bf16.gmra.mxu0 %v793
    %v829 = vpop.f32.mrf.mxu0
    %v830 = vadd.f32 %v765, %v829
    %v831 = vpop.f32.mrf.mxu0
    %v832 = vpop.f32.mrf.mxu0
    %v833 = vadd.f32 %v765, %v832
    %v834 = vpop.f32.mrf.mxu0
    %835 = vdwg.mxu0
    %v836 = vmax.f32 %v830, 0.0
    %v837 = vmax.f32 %v833, 0.0
    %v838 = vpack.c.bf16 %v837, %v836
    %v839 = vld [vmem:[%s7] sm:$0xf]
    %v840 = vld [vmem:[%s7 + $0x4] sm:$0xf]
    %v841 = vld [vmem:[%s7 + $0x8] sm:$0x3]
    %v842 = vld [vmem:[%s8] sm:$0x1]
    %v844 = vlaneseq
    %v845 = vshrl.u32 %v844, 7
    %v846 = vsub.s32 0, %v845
    %v847 = vrot.slane %v842, %v846
    %v852 = vunpack.c.l.b16 %v839
    %v853 = vunpack.c.l.b16 %v840
    %v854 = vunpack.c.l.b16 %v841
    %v855 = vpack.c.b16 %v853, %v852
    %v856 = vpack.c.b16 %v854, %v854
    %vm858 = vcmask 162816
    %v860 = vsel %vm858, %v838, 0
    %vm862 = vcmask 1041408
    %v864 = vsel %vm862, %v856, 0
    %866 = vmatprep.subr.bf16.mxu0 0
    %867 = vmatpush1.bf16.msra.mxu0 0
    %868 = vmatprep.subr.bf16.mxu0 0
    %869 = vmatpush1.bf16.msra.mxu0 0
    %870 = vmatprep.subr.bf16.mxu0 0
    %871 = vmatpush1.bf16.msra.mxu0 0
    %872 = vmatprep.subr.bf16.mxu0 0
    %873 = vmatpush1.bf16.msra.mxu0 0
    %874 = vmatprep.subr.bf16.mxu0 0
    %875 = vmatpush1.bf16.msra.mxu0 0
    %876 = vmatprep.subr.bf16.mxu0 0
    %877 = vmatpush1.bf16.msra.mxu0 0
    %878 = vmatprep.subr.bf16.mxu0 0
    %879 = vmatpush1.bf16.msra.mxu0 %v864
    %880 = vmatprep.subr.bf16.mxu0 0
    %881 = vmatpush1.bf16.msra.mxu0 %v855
    %882 = vmatprep.subr.bf16.mxu0 0
    %883 = vmatpush2.bf16.msra.mxu0 0
    %884 = vmatprep.subr.bf16.mxu0 0
    %885 = vmatpush2.bf16.msra.mxu0 0
    %886 = vmatprep.subr.bf16.mxu0 0
    %887 = vmatpush2.bf16.msra.mxu0 0
    %888 = vmatprep.subr.bf16.mxu0 0
    %889 = vmatpush2.bf16.msra.mxu0 0
    %890 = vmatprep.subr.bf16.mxu0 0
    %891 = vmatpush2.bf16.msra.mxu0 0
    %892 = vmatprep.subr.bf16.mxu0 0
    %893 = vmatpush2.bf16.msra.mxu0 0
    %894 = vmatprep.subr.bf16.mxu0 0
    %895 = vmatpush2.bf16.msra.mxu0 0
    %896 = vmatprep.subr.bf16.mxu0 0
    %897 = vmatpush2.bf16.msra.mxu0 0
    %898 = vmatprep.mubr.bf16.mxu0 0
    %899 = vmatmul.mubr.bf16.gmra.mxu0 %v860
    %v900 = vpop.f32.mrf.mxu0
    %v901 = vadd.f32 %v847, %v900
    %v902 = vpop.f32.mrf.mxu0
    %v903 = vpop.f32.mrf.mxu0
    %v904 = vadd.f32 %v847, %v903
    %v905 = vpop.f32.mrf.mxu0
    %906 = vdwg.mxu0
    %v907 = vmax.f32 %v901, 0.0
    %v908 = vmax.f32 %v904, 0.0
    %v909 = vpack.c.bf16 %v908, %v907
    %v910 = vld [vmem:[%s9] sm:$0xf]
    %v911 = vld [vmem:[%s9 + $0x4] sm:$0xf]
    %v912 = vld [vmem:[%s9 + $0x8] sm:$0xf]
    %v913 = vld [vmem:[%s9 + $0xc] sm:$0xf]
    %v914 = vld [vmem:[%s9 + $0x10] sm:$0xf]
    %v915 = vld [vmem:[%s9 + $0x14] sm:$0xf]
    %v916 = vld [vmem:[%s9 + $0x18] sm:$0xf]
    %v917 = vld [vmem:[%s9 + $0x1c] sm:$0xf]
    %v918 = vld [vmem:[%s10] sm:$0x1]
    %v920 = vlaneseq
    %v921 = vshrl.u32 %v920, 7
    %v922 = vsub.s32 0, %v921
    %v923 = vrot.slane %v918, %v922
    %v933 = vunpack.c.l.b16 %v910
    %v934 = vunpack.c.l.b16 %v911
    %v935 = vunpack.c.l.b16 %v912
    %v936 = vunpack.c.l.b16 %v913
    %v937 = vunpack.c.l.b16 %v914
    %v938 = vunpack.c.l.b16 %v915
    %v939 = vunpack.c.l.b16 %v916
    %v940 = vunpack.c.l.b16 %v917
    %v941 = vpack.c.b16 %v934, %v933
    %v942 = vpack.c.b16 %v936, %v935
    %v943 = vpack.c.b16 %v938, %v937
    %v944 = vpack.c.b16 %v940, %v939
    %v950 = vsel %vm791, %v909, 0
    %952 = vmatprep.subr.bf16.mxu0 0
    %953 = vmatpush1.bf16.msra.mxu0 0
    %954 = vmatprep.subr.bf16.mxu0 0
    %955 = vmatpush1.bf16.msra.mxu0 0
    %956 = vmatprep.subr.bf16.mxu0 0
    %957 = vmatpush1.bf16.msra.mxu0 0
    %958 = vmatprep.subr.bf16.mxu0 0
    %959 = vmatpush1.bf16.msra.mxu0 0
    %960 = vmatprep.subr.bf16.mxu0 0
    %961 = vmatpush1.bf16.msra.mxu0 %v944
    %962 = vmatprep.subr.bf16.mxu0 0
    %963 = vmatpush1.bf16.msra.mxu0 %v943
    %964 = vmatprep.subr.bf16.mxu0 0
    %965 = vmatpush1.bf16.msra.mxu0 %v942
    %966 = vmatprep.subr.bf16.mxu0 0
    %967 = vmatpush1.bf16.msra.mxu0 %v941
    %968 = vmatprep.subr.bf16.mxu0 0
    %969 = vmatpush2.bf16.msra.mxu0 0
    %970 = vmatprep.subr.bf16.mxu0 0
    %971 = vmatpush2.bf16.msra.mxu0 0
    %972 = vmatprep.subr.bf16.mxu0 0
    %973 = vmatpush2.bf16.msra.mxu0 0
    %974 = vmatprep.subr.bf16.mxu0 0
    %975 = vmatpush2.bf16.msra.mxu0 0
    %976 = vmatprep.subr.bf16.mxu0 0
    %977 = vmatpush2.bf16.msra.mxu0 0
    %978 = vmatprep.subr.bf16.mxu0 0
    %979 = vmatpush2.bf16.msra.mxu0 0
    %980 = vmatprep.subr.bf16.mxu0 0
    %981 = vmatpush2.bf16.msra.mxu0 0
    %982 = vmatprep.subr.bf16.mxu0 0
    %983 = vmatpush2.bf16.msra.mxu0 0
    %984 = vmatprep.mubr.bf16.mxu0 0
    %985 = vmatmul.mubr.bf16.gmra.mxu0 %v950
    %v986 = vpop.f32.mrf.mxu0
    %v987 = vadd.f32 %v923, %v986
    %v988 = vpop.f32.mrf.mxu0
    %v989 = vpop.f32.mrf.mxu0
    %v990 = vadd.f32 %v923, %v989
    %v991 = vpop.f32.mrf.mxu0
    %992 = vdwg.mxu0
    %v993 = vmax.f32 %v987, 0.0
    %v994 = vmax.f32 %v990, 0.0
    %v995 = vpack.c.bf16 %v994, %v993
    %v996 = vld [vmem:[%s11] sm:$0xff]
    %v997 = vld [vmem:[%s11 + $0x8] sm:$0xff]
    %v998 = vld [vmem:[%s11 + $0x10] sm:$0xff]
    %v999 = vld [vmem:[%s11 + $0x18] sm:$0xf]
    %v1000 = vld [vmem:[%s11 + $0x1c] sm:$0xff]
    %v1001 = vld [vmem:[%s11 + $0x24] sm:$0xff]
    %v1002 = vld [vmem:[%s11 + $0x2c] sm:$0xff]
    %v1003 = vld [vmem:[%s11 + $0x34] sm:$0xf]
    %v1004 = vld [vmem:[%s11 + $0x38] sm:$0xff]
    %v1005 = vld [vmem:[%s11 + $0x40] sm:$0xff]
    %v1006 = vld [vmem:[%s11 + $0x48] sm:$0xff]
    %v1007 = vld [vmem:[%s11 + $0x50] sm:$0xf]
    %v1008 = vld [vmem:[%s11 + $0x54] sm:$0xff]
    %v1009 = vld [vmem:[%s11 + $0x5c] sm:$0xff]
    %v1010 = vld [vmem:[%s11 + $0x64] sm:$0xff]
    %v1011 = vld [vmem:[%s11 + $0x6c] sm:$0xf]
    %v1012 = vld [vmem:[%s11 + $0x70] sm:$0xff]
    %v1013 = vld [vmem:[%s11 + $0x78] sm:$0xff]
    %v1014 = vld [vmem:[%s11 + $0x80] sm:$0xff]
    %v1015 = vld [vmem:[%s11 + $0x88] sm:$0xf]
    %v1016 = vld [vmem:[%s11 + $0x8c] sm:$0xff]
    %v1017 = vld [vmem:[%s11 + $0x94] sm:$0xff]
    %v1018 = vld [vmem:[%s11 + $0x9c] sm:$0xff]
    %v1019 = vld [vmem:[%s11 + $0xa4] sm:$0xf]
    %v1020 = vld [vmem:[%s11 + $0xa8] sm:$0xff]
    %v1021 = vld [vmem:[%s11 + $0xb0] sm:$0xff]
    %v1022 = vld [vmem:[%s11 + $0xb8] sm:$0xff]
    %v1023 = vld [vmem:[%s11 + $0xc0] sm:$0xf]
    %v1024 = vld [vmem:[%s11 + $0xc4] sm:$0xff]
    %v1025 = vld [vmem:[%s11 + $0xcc] sm:$0xff]
    %v1026 = vld [vmem:[%s11 + $0xd4] sm:$0xff]
    %v1027 = vld [vmem:[%s11 + $0xdc] sm:$0xf]
    %v1028 = vld [vmem:[%s11 + $0xe0] sm:$0xff]
    %v1029 = vld [vmem:[%s11 + $0xe8] sm:$0xff]
    %v1030 = vld [vmem:[%s11 + $0xf0] sm:$0xff]
    %v1031 = vld [vmem:[%s11 + $0xf8] sm:$0xf]
    %v1032 = vld [vmem:[%s11 + $0xfc] sm:$0xff]
    %v1033 = vld [vmem:[%s11 + $0x104] sm:$0xff]
    %v1034 = vld [vmem:[%s11 + $0x10c] sm:$0xff]
    %v1035 = vld [vmem:[%s11 + $0x114] sm:$0xf]
    %v1036 = vld [vmem:[%s11 + $0x118] sm:$0xff]
    %v1037 = vld [vmem:[%s11 + $0x120] sm:$0xff]
    %v1038 = vld [vmem:[%s11 + $0x128] sm:$0xff]
    %v1039 = vld [vmem:[%s11 + $0x130] sm:$0xf]
    %v1040 = vld [vmem:[%s11 + $0x134] sm:$0xff]
    %v1041 = vld [vmem:[%s11 + $0x13c] sm:$0xff]
    %v1042 = vld [vmem:[%s11 + $0x144] sm:$0xff]
    %v1043 = vld [vmem:[%s11 + $0x14c] sm:$0xf]
    %v1044 = vld [vmem:[%s11 + $0x150] sm:$0xff]
    %v1045 = vld [vmem:[%s11 + $0x158] sm:$0xff]
    %v1046 = vld [vmem:[%s11 + $0x160] sm:$0xff]
    %v1047 = vld [vmem:[%s11 + $0x168] sm:$0xf]
    %v1048 = vld [vmem:[%s11 + $0x16c] sm:$0xff]
    %v1049 = vld [vmem:[%s11 + $0x174] sm:$0xff]
    %v1050 = vld [vmem:[%s11 + $0x17c] sm:$0xff]
    %v1051 = vld [vmem:[%s11 + $0x184] sm:$0xf]
    %v1052 = vld [vmem:[%s11 + $0x188] sm:$0xff]
    %v1053 = vld [vmem:[%s11 + $0x190] sm:$0xff]
    %v1054 = vld [vmem:[%s11 + $0x198] sm:$0xff]
    %v1055 = vld [vmem:[%s11 + $0x1a0] sm:$0xf]
    %v1056 = vld [vmem:[%s11 + $0x1a4] sm:$0xff]
    %v1057 = vld [vmem:[%s11 + $0x1ac] sm:$0xff]
    %v1058 = vld [vmem:[%s11 + $0x1b4] sm:$0xff]
    %v1059 = vld [vmem:[%s11 + $0x1bc] sm:$0xf]
    %v1060 = vld [vmem:[%s12] sm:$0x7f]
    %v1062 = vlaneseq
    %v1063 = vshrl.u32 %v1062, 7
    %v1064 = vsub.s32 0, %v1063
    %v1065 = vrot.slane %v1060, %v1064
    %v1066 = vlaneseq
    %v1067 = vshrl.u32 %v1066, 7
    %v1068 = vsub.s32 1, %v1067
    %v1069 = vrot.slane %v1060, %v1068
    %v1070 = vlaneseq
    %v1071 = vshrl.u32 %v1070, 7
    %v1072 = vsub.s32 2, %v1071
    %v1073 = vrot.slane %v1060, %v1072
    %v1074 = vlaneseq
    %v1075 = vshrl.u32 %v1074, 7
    %v1076 = vsub.s32 3, %v1075
    %v1077 = vrot.slane %v1060, %v1076
    %v1078 = vlaneseq
    %v1079 = vshrl.u32 %v1078, 7
    %v1080 = vsub.s32 4, %v1079
    %v1081 = vrot.slane %v1060, %v1080
    %v1082 = vlaneseq
    %v1083 = vshrl.u32 %v1082, 7
    %v1084 = vsub.s32 5, %v1083
    %v1085 = vrot.slane %v1060, %v1084
    %v1086 = vlaneseq
    %v1087 = vshrl.u32 %v1086, 7
    %v1088 = vsub.s32 6, %v1087
    %v1089 = vrot.slane %v1060, %v1088
    %v1161 = vunpack.c.l.b16 %v996
    %v1162 = vunpack.c.h.b16 %v996
    %v1163 = vunpack.c.l.b16 %v997
    %v1164 = vunpack.c.h.b16 %v997
    %v1165 = vunpack.c.l.b16 %v998
    %v1166 = vunpack.c.h.b16 %v998
    %v1167 = vunpack.c.l.b16 %v999
    %v1168 = vunpack.c.l.b16 %v1000
    %v1169 = vunpack.c.h.b16 %v1000
    %v1170 = vunpack.c.l.b16 %v1001
    %v1171 = vunpack.c.h.b16 %v1001
    %v1172 = vunpack.c.l.b16 %v1002
    %v1173 = vunpack.c.h.b16 %v1002
    %v1174 = vunpack.c.l.b16 %v1003
    %v1175 = vunpack.c.l.b16 %v1004
    %v1176 = vunpack.c.h.b16 %v1004
    %v1177 = vunpack.c.l.b16 %v1005
    %v1178 = vunpack.c.h.b16 %v1005
    %v1179 = vunpack.c.l.b16 %v1006
    %v1180 = vunpack.c.h.b16 %v1006
    %v1181 = vunpack.c.l.b16 %v1007
    %v1182 = vunpack.c.l.b16 %v1008
    %v1183 = vunpack.c.h.b16 %v1008
    %v1184 = vunpack.c.l.b16 %v1009
    %v1185 = vunpack.c.h.b16 %v1009
    %v1186 = vunpack.c.l.b16 %v1010
    %v1187 = vunpack.c.h.b16 %v1010
    %v1188 = vunpack.c.l.b16 %v1011
    %v1189 = vunpack.c.l.b16 %v1012
    %v1190 = vunpack.c.h.b16 %v1012
    %v1191 = vunpack.c.l.b16 %v1013
    %v1192 = vunpack.c.h.b16 %v1013
    %v1193 = vunpack.c.l.b16 %v1014
    %v1194 = vunpack.c.h.b16 %v1014
    %v1195 = vunpack.c.l.b16 %v1015
    %v1196 = vunpack.c.l.b16 %v1016
    %v1197 = vunpack.c.h.b16 %v1016
    %v1198 = vunpack.c.l.b16 %v1017
    %v1199 = vunpack.c.h.b16 %v1017
    %v1200 = vunpack.c.l.b16 %v1018
    %v1201 = vunpack.c.h.b16 %v1018
    %v1202 = vunpack.c.l.b16 %v1019
    %v1203 = vunpack.c.l.b16 %v1020
    %v1204 = vunpack.c.h.b16 %v1020
    %v1205 = vunpack.c.l.b16 %v1021
    %v1206 = vunpack.c.h.b16 %v1021
    %v1207 = vunpack.c.l.b16 %v1022
    %v1208 = vunpack.c.h.b16 %v1022
    %v1209 = vunpack.c.l.b16 %v1023
    %v1210 = vunpack.c.l.b16 %v1024
    %v1211 = vunpack.c.h.b16 %v1024
    %v1212 = vunpack.c.l.b16 %v1025
    %v1213 = vunpack.c.h.b16 %v1025
    %v1214 = vunpack.c.l.b16 %v1026
    %v1215 = vunpack.c.h.b16 %v1026
    %v1216 = vunpack.c.l.b16 %v1027
    %v1217 = vunpack.c.l.b16 %v1028
    %v1218 = vunpack.c.h.b16 %v1028
    %v1219 = vunpack.c.l.b16 %v1029
    %v1220 = vunpack.c.h.b16 %v1029
    %v1221 = vunpack.c.l.b16 %v1030
    %v1222 = vunpack.c.h.b16 %v1030
    %v1223 = vunpack.c.l.b16 %v1031
    %v1224 = vunpack.c.l.b16 %v1032
    %v1225 = vunpack.c.h.b16 %v1032
    %v1226 = vunpack.c.l.b16 %v1033
    %v1227 = vunpack.c.h.b16 %v1033
    %v1228 = vunpack.c.l.b16 %v1034
    %v1229 = vunpack.c.h.b16 %v1034
    %v1230 = vunpack.c.l.b16 %v1035
    %v1231 = vunpack.c.l.b16 %v1036
    %v1232 = vunpack.c.h.b16 %v1036
    %v1233 = vunpack.c.l.b16 %v1037
    %v1234 = vunpack.c.h.b16 %v1037
    %v1235 = vunpack.c.l.b16 %v1038
    %v1236 = vunpack.c.h.b16 %v1038
    %v1237 = vunpack.c.l.b16 %v1039
    %v1238 = vunpack.c.l.b16 %v1040
    %v1239 = vunpack.c.h.b16 %v1040
    %v1240 = vunpack.c.l.b16 %v1041
    %v1241 = vunpack.c.h.b16 %v1041
    %v1242 = vunpack.c.l.b16 %v1042
    %v1243 = vunpack.c.h.b16 %v1042
    %v1244 = vunpack.c.l.b16 %v1043
    %v1245 = vunpack.c.l.b16 %v1044
    %v1246 = vunpack.c.h.b16 %v1044
    %v1247 = vunpack.c.l.b16 %v1045
    %v1248 = vunpack.c.h.b16 %v1045
    %v1249 = vunpack.c.l.b16 %v1046
    %v1250 = vunpack.c.h.b16 %v1046
    %v1251 = vunpack.c.l.b16 %v1047
    %v1252 = vunpack.c.l.b16 %v1048
    %v1253 = vunpack.c.h.b16 %v1048
    %v1254 = vunpack.c.l.b16 %v1049
    %v1255 = vunpack.c.h.b16 %v1049
    %v1256 = vunpack.c.l.b16 %v1050
    %v1257 = vunpack.c.h.b16 %v1050
    %v1258 = vunpack.c.l.b16 %v1051
    %v1259 = vunpack.c.l.b16 %v1052
    %v1260 = vunpack.c.h.b16 %v1052
    %v1261 = vunpack.c.l.b16 %v1053
    %v1262 = vunpack.c.h.b16 %v1053
    %v1263 = vunpack.c.l.b16 %v1054
    %v1264 = vunpack.c.h.b16 %v1054
    %v1265 = vunpack.c.l.b16 %v1055
    %v1266 = vunpack.c.l.b16 %v1056
    %v1267 = vunpack.c.h.b16 %v1056
    %v1268 = vunpack.c.l.b16 %v1057
    %v1269 = vunpack.c.h.b16 %v1057
    %v1270 = vunpack.c.l.b16 %v1058
    %v1271 = vunpack.c.h.b16 %v1058
    %v1272 = vunpack.c.l.b16 %v1059
    %v1273 = vpack.c.b16 %v1168, %v1161
    %v1274 = vpack.c.b16 %v1169, %v1162
    %v1275 = vpack.c.b16 %v1170, %v1163
    %v1276 = vpack.c.b16 %v1171, %v1164
    %v1277 = vpack.c.b16 %v1172, %v1165
    %v1278 = vpack.c.b16 %v1173, %v1166
    %v1279 = vpack.c.b16 %v1174, %v1167
    %v1280 = vpack.c.b16 %v1182, %v1175
    %v1281 = vpack.c.b16 %v1183, %v1176
    %v1282 = vpack.c.b16 %v1184, %v1177
    %v1283 = vpack.c.b16 %v1185, %v1178
    %v1284 = vpack.c.b16 %v1186, %v1179
    %v1285 = vpack.c.b16 %v1187, %v1180
    %v1286 = vpack.c.b16 %v1188, %v1181
    %v1287 = vpack.c.b16 %v1196, %v1189
    %v1288 = vpack.c.b16 %v1197, %v1190
    %v1289 = vpack.c.b16 %v1198, %v1191
    %v1290 = vpack.c.b16 %v1199, %v1192
    %v1291 = vpack.c.b16 %v1200, %v1193
    %v1292 = vpack.c.b16 %v1201, %v1194
    %v1293 = vpack.c.b16 %v1202, %v1195
    %v1294 = vpack.c.b16 %v1210, %v1203
    %v1295 = vpack.c.b16 %v1211, %v1204
    %v1296 = vpack.c.b16 %v1212, %v1205
    %v1297 = vpack.c.b16 %v1213, %v1206
    %v1298 = vpack.c.b16 %v1214, %v1207
    %v1299 = vpack.c.b16 %v1215, %v1208
    %v1300 = vpack.c.b16 %v1216, %v1209
    %v1301 = vpack.c.b16 %v1224, %v1217
    %v1302 = vpack.c.b16 %v1225, %v1218
    %v1303 = vpack.c.b16 %v1226, %v1219
    %v1304 = vpack.c.b16 %v1227, %v1220
    %v1305 = vpack.c.b16 %v1228, %v1221
    %v1306 = vpack.c.b16 %v1229, %v1222
    %v1307 = vpack.c.b16 %v1230, %v1223
    %v1308 = vpack.c.b16 %v1238, %v1231
    %v1309 = vpack.c.b16 %v1239, %v1232
    %v1310 = vpack.c.b16 %v1240, %v1233
    %v1311 = vpack.c.b16 %v1241, %v1234
    %v1312 = vpack.c.b16 %v1242, %v1235
    %v1313 = vpack.c.b16 %v1243, %v1236
    %v1314 = vpack.c.b16 %v1244, %v1237
    %v1315 = vpack.c.b16 %v1252, %v1245
    %v1316 = vpack.c.b16 %v1253, %v1246
    %v1317 = vpack.c.b16 %v1254, %v1247
    %v1318 = vpack.c.b16 %v1255, %v1248
    %v1319 = vpack.c.b16 %v1256, %v1249
    %v1320 = vpack.c.b16 %v1257, %v1250
    %v1321 = vpack.c.b16 %v1258, %v1251
    %v1322 = vpack.c.b16 %v1266, %v1259
    %v1323 = vpack.c.b16 %v1267, %v1260
    %v1324 = vpack.c.b16 %v1268, %v1261
    %v1325 = vpack.c.b16 %v1269, %v1262
    %v1326 = vpack.c.b16 %v1270, %v1263
    %v1327 = vpack.c.b16 %v1271, %v1264
    %v1328 = vpack.c.b16 %v1272, %v1265
    %1385 = vmatprep.subr.bf16.mxu0 %v1323
    %1386 = vmatpush1.bf16.msra.mxu0 %v1322
    %1387 = vmatprep.subr.bf16.mxu0 %v1316
    %1388 = vmatpush1.bf16.msra.mxu0 %v1315
    %1389 = vmatprep.subr.bf16.mxu0 %v1309
    %1390 = vmatpush1.bf16.msra.mxu0 %v1308
    %1391 = vmatprep.subr.bf16.mxu0 %v1302
    %1392 = vmatpush1.bf16.msra.mxu0 %v1301
    %1393 = vmatprep.subr.bf16.mxu0 %v1295
    %1394 = vmatpush1.bf16.msra.mxu0 %v1294
    %1395 = vmatprep.subr.bf16.mxu0 %v1288
    %1396 = vmatpush1.bf16.msra.mxu0 %v1287
    %1397 = vmatprep.subr.bf16.mxu0 %v1281
    %1398 = vmatpush1.bf16.msra.mxu0 %v1280
    %1399 = vmatprep.subr.bf16.mxu0 %v1274
    %1400 = vmatpush1.bf16.msra.mxu0 %v1273
    %1401 = vmatprep.subr.bf16.mxu0 0
    %1402 = vmatpush2.bf16.msra.mxu0 0
    %1403 = vmatprep.subr.bf16.mxu0 0
    %1404 = vmatpush2.bf16.msra.mxu0 0
    %1405 = vmatprep.subr.bf16.mxu0 0
    %1406 = vmatpush2.bf16.msra.mxu0 0
    %1407 = vmatprep.subr.bf16.mxu0 0
    %1408 = vmatpush2.bf16.msra.mxu0 0
    %1409 = vmatprep.subr.bf16.mxu0 0
    %1410 = vmatpush2.bf16.msra.mxu0 0
    %1411 = vmatprep.subr.bf16.mxu0 0
    %1412 = vmatpush2.bf16.msra.mxu0 0
    %1413 = vmatprep.subr.bf16.mxu0 0
    %1414 = vmatpush2.bf16.msra.mxu0 0
    %1415 = vmatprep.subr.bf16.mxu0 0
    %1416 = vmatpush2.bf16.msra.mxu0 0
    %1417 = vmatprep.mubr.bf16.mxu0 0
    %1418 = vmatmul.mubr.bf16.gmra.mxu0 %v995
    %v1419 = vpop.f32.mrf.mxu0
    %v1420 = vadd.f32 %v1065, %v1419
    %v1421 = vpop.f32.mrf.mxu0
    %v1422 = vadd.f32 %v1069, %v1421
    %v1423 = vpop.f32.mrf.mxu0
    %v1424 = vadd.f32 %v1065, %v1423
    %v1425 = vpop.f32.mrf.mxu0
    %v1426 = vadd.f32 %v1069, %v1425
    %1427 = vdwg.mxu0
    %1428 = vmatprep.subr.bf16.mxu0 %v1325
    %1429 = vmatpush1.bf16.msra.mxu0 %v1324
    %1430 = vmatprep.subr.bf16.mxu0 %v1318
    %1431 = vmatpush1.bf16.msra.mxu0 %v1317
    %1432 = vmatprep.subr.bf16.mxu0 %v1311
    %1433 = vmatpush1.bf16.msra.mxu0 %v1310
    %1434 = vmatprep.subr.bf16.mxu0 %v1304
    %1435 = vmatpush1.bf16.msra.mxu0 %v1303
    %1436 = vmatprep.subr.bf16.mxu0 %v1297
    %1437 = vmatpush1.bf16.msra.mxu0 %v1296
    %1438 = vmatprep.subr.bf16.mxu0 %v1290
    %1439 = vmatpush1.bf16.msra.mxu0 %v1289
    %1440 = vmatprep.subr.bf16.mxu0 %v1283
    %1441 = vmatpush1.bf16.msra.mxu0 %v1282
    %1442 = vmatprep.subr.bf16.mxu0 %v1276
    %1443 = vmatpush1.bf16.msra.mxu0 %v1275
    %1444 = vmatprep.subr.bf16.mxu0 0
    %1445 = vmatpush2.bf16.msra.mxu0 0
    %1446 = vmatprep.subr.bf16.mxu0 0
    %1447 = vmatpush2.bf16.msra.mxu0 0
    %1448 = vmatprep.subr.bf16.mxu0 0
    %1449 = vmatpush2.bf16.msra.mxu0 0
    %1450 = vmatprep.subr.bf16.mxu0 0
    %1451 = vmatpush2.bf16.msra.mxu0 0
    %1452 = vmatprep.subr.bf16.mxu0 0
    %1453 = vmatpush2.bf16.msra.mxu0 0
    %1454 = vmatprep.subr.bf16.mxu0 0
    %1455 = vmatpush2.bf16.msra.mxu0 0
    %1456 = vmatprep.subr.bf16.mxu0 0
    %1457 = vmatpush2.bf16.msra.mxu0 0
    %1458 = vmatprep.subr.bf16.mxu0 0
    %1459 = vmatpush2.bf16.msra.mxu0 0
    %1460 = vmatprep.mubr.bf16.mxu0 0
    %1461 = vmatmul.mubr.bf16.gmra.mxu0 %v995
    %v1462 = vpop.f32.mrf.mxu0
    %v1463 = vadd.f32 %v1073, %v1462
    %v1464 = vpop.f32.mrf.mxu0
    %v1465 = vadd.f32 %v1077, %v1464
    %v1466 = vpop.f32.mrf.mxu0
    %v1467 = vadd.f32 %v1073, %v1466
    %v1468 = vpop.f32.mrf.mxu0
    %v1469 = vadd.f32 %v1077, %v1468
    %1470 = vdwg.mxu0
    %1471 = vmatprep.subr.bf16.mxu0 %v1327
    %1472 = vmatpush1.bf16.msra.mxu0 %v1326
    %1473 = vmatprep.subr.bf16.mxu0 %v1320
    %1474 = vmatpush1.bf16.msra.mxu0 %v1319
    %1475 = vmatprep.subr.bf16.mxu0 %v1313
    %1476 = vmatpush1.bf16.msra.mxu0 %v1312
    %1477 = vmatprep.subr.bf16.mxu0 %v1306
    %1478 = vmatpush1.bf16.msra.mxu0 %v1305
    %1479 = vmatprep.subr.bf16.mxu0 %v1299
    %1480 = vmatpush1.bf16.msra.mxu0 %v1298
    %1481 = vmatprep.subr.bf16.mxu0 %v1292
    %1482 = vmatpush1.bf16.msra.mxu0 %v1291
    %1483 = vmatprep.subr.bf16.mxu0 %v1285
    %1484 = vmatpush1.bf16.msra.mxu0 %v1284
    %1485 = vmatprep.subr.bf16.mxu0 %v1278
    %1486 = vmatpush1.bf16.msra.mxu0 %v1277
    %1487 = vmatprep.subr.bf16.mxu0 0
    %1488 = vmatpush2.bf16.msra.mxu0 0
    %1489 = vmatprep.subr.bf16.mxu0 0
    %1490 = vmatpush2.bf16.msra.mxu0 0
    %1491 = vmatprep.subr.bf16.mxu0 0
    %1492 = vmatpush2.bf16.msra.mxu0 0
    %1493 = vmatprep.subr.bf16.mxu0 0
    %1494 = vmatpush2.bf16.msra.mxu0 0
    %1495 = vmatprep.subr.bf16.mxu0 0
    %1496 = vmatpush2.bf16.msra.mxu0 0
    %1497 = vmatprep.subr.bf16.mxu0 0
    %1498 = vmatpush2.bf16.msra.mxu0 0
    %1499 = vmatprep.subr.bf16.mxu0 0
    %1500 = vmatpush2.bf16.msra.mxu0 0
    %1501 = vmatprep.subr.bf16.mxu0 0
    %1502 = vmatpush2.bf16.msra.mxu0 0
    %1503 = vmatprep.mubr.bf16.mxu0 0
    %1504 = vmatmul.mubr.bf16.gmra.mxu0 %v995
    %v1505 = vpop.f32.mrf.mxu0
    %v1506 = vadd.f32 %v1081, %v1505
    %v1507 = vpop.f32.mrf.mxu0
    %v1508 = vadd.f32 %v1085, %v1507
    %v1509 = vpop.f32.mrf.mxu0
    %v1510 = vadd.f32 %v1081, %v1509
    %v1511 = vpop.f32.mrf.mxu0
    %v1512 = vadd.f32 %v1085, %v1511
    %1513 = vdwg.mxu0
    %1514 = vmatprep.subr.bf16.mxu0 0
    %1515 = vmatpush1.bf16.msra.mxu0 %v1328
    %1516 = vmatprep.subr.bf16.mxu0 0
    %1517 = vmatpush1.bf16.msra.mxu0 %v1321
    %1518 = vmatprep.subr.bf16.mxu0 0
    %1519 = vmatpush1.bf16.msra.mxu0 %v1314
    %1520 = vmatprep.subr.bf16.mxu0 0
    %1521 = vmatpush1.bf16.msra.mxu0 %v1307
    %1522 = vmatprep.subr.bf16.mxu0 0
    %1523 = vmatpush1.bf16.msra.mxu0 %v1300
    %1524 = vmatprep.subr.bf16.mxu0 0
    %1525 = vmatpush1.bf16.msra.mxu0 %v1293
    %1526 = vmatprep.subr.bf16.mxu0 0
    %1527 = vmatpush1.bf16.msra.mxu0 %v1286
    %1528 = vmatprep.subr.bf16.mxu0 0
    %1529 = vmatpush1.bf16.msra.mxu0 %v1279
    %1530 = vmatprep.subr.bf16.mxu0 0
    %1531 = vmatpush2.bf16.msra.mxu0 0
    %1532 = vmatprep.subr.bf16.mxu0 0
    %1533 = vmatpush2.bf16.msra.mxu0 0
    %1534 = vmatprep.subr.bf16.mxu0 0
    %1535 = vmatpush2.bf16.msra.mxu0 0
    %1536 = vmatprep.subr.bf16.mxu0 0
    %1537 = vmatpush2.bf16.msra.mxu0 0
    %1538 = vmatprep.subr.bf16.mxu0 0
    %1539 = vmatpush2.bf16.msra.mxu0 0
    %1540 = vmatprep.subr.bf16.mxu0 0
    %1541 = vmatpush2.bf16.msra.mxu0 0
    %1542 = vmatprep.subr.bf16.mxu0 0
    %1543 = vmatpush2.bf16.msra.mxu0 0
    %1544 = vmatprep.subr.bf16.mxu0 0
    %1545 = vmatpush2.bf16.msra.mxu0 0
    %1546 = vmatprep.mubr.bf16.mxu0 0
    %1547 = vmatmul.mubr.bf16.gmra.mxu0 %v995
    %v1548 = vpop.f32.mrf.mxu0
    %v1549 = vadd.f32 %v1089, %v1548
    %v1550 = vpop.f32.mrf.mxu0
    %v1551 = vpop.f32.mrf.mxu0
    %v1552 = vadd.f32 %v1089, %v1551
    %v1553 = vpop.f32.mrf.mxu0
    %1554 = vdwg.mxu0
    %v1555 = vxor.u32 %v1420, 2147483648
    %v1556 = vxor.u32 %v1422, 2147483648
    %v1557 = vxor.u32 %v1463, 2147483648
    %v1558 = vxor.u32 %v1465, 2147483648
    %v1559 = vxor.u32 %v1506, 2147483648
    %v1560 = vxor.u32 %v1508, 2147483648
    %v1561 = vxor.u32 %v1549, 2147483648
    %v1562 = vxor.u32 %v1424, 2147483648
    %v1563 = vxor.u32 %v1426, 2147483648
    %v1564 = vxor.u32 %v1467, 2147483648
    %v1565 = vxor.u32 %v1469, 2147483648
    %v1566 = vxor.u32 %v1510, 2147483648
    %v1567 = vxor.u32 %v1512, 2147483648
    %v1568 = vxor.u32 %v1552, 2147483648
    %v1569 = vmul.f32 %v1555, 1.442695
    %v1570 = vpow.pop %v1569
    %v1571 = vmul.f32 %v1556, 1.442695
    %v1572 = vpow.pop %v1571
    %v1573 = vmul.f32 %v1557, 1.442695
    %v1574 = vpow.pop %v1573
    %v1575 = vmul.f32 %v1558, 1.442695
    %v1576 = vpow.pop %v1575
    %v1577 = vmul.f32 %v1559, 1.442695
    %v1578 = vpow.pop %v1577
    %v1579 = vmul.f32 %v1560, 1.442695
    %v1580 = vpow.pop %v1579
    %v1581 = vmul.f32 %v1561, 1.442695
    %v1582 = vpow.pop %v1581
    %v1583 = vmul.f32 %v1562, 1.442695
    %v1584 = vpow.pop %v1583
    %v1585 = vmul.f32 %v1563, 1.442695
    %v1586 = vpow.pop %v1585
    %v1587 = vmul.f32 %v1564, 1.442695
    %v1588 = vpow.pop %v1587
    %v1589 = vmul.f32 %v1565, 1.442695
    %v1590 = vpow.pop %v1589
    %v1591 = vmul.f32 %v1566, 1.442695
    %v1592 = vpow.pop %v1591
    %v1593 = vmul.f32 %v1567, 1.442695
    %v1594 = vpow.pop %v1593
    %v1595 = vmul.f32 %v1568, 1.442695
    %v1596 = vpow.pop %v1595
    %v1597 = vadd.f32 %v1570, 1.0
    %v1598 = vadd.f32 %v1572, 1.0
    %v1599 = vadd.f32 %v1574, 1.0
    %v1600 = vadd.f32 %v1576, 1.0
    %v1601 = vadd.f32 %v1578, 1.0
    %v1602 = vadd.f32 %v1580, 1.0
    %v1603 = vadd.f32 %v1582, 1.0
    %v1604 = vadd.f32 %v1584, 1.0
    %v1605 = vadd.f32 %v1586, 1.0
    %v1606 = vadd.f32 %v1588, 1.0
    %v1607 = vadd.f32 %v1590, 1.0
    %v1608 = vadd.f32 %v1592, 1.0
    %v1609 = vadd.f32 %v1594, 1.0
    %v1610 = vadd.f32 %v1596, 1.0
    %v1611 = vrcp.pop %v1597
    %v1612 = vmul.f32 1.0, %v1611
    %v1613 = vrcp.pop %v1598
    %v1614 = vmul.f32 1.0, %v1613
    %v1615 = vrcp.pop %v1599
    %v1616 = vmul.f32 1.0, %v1615
    %v1617 = vrcp.pop %v1600
    %v1618 = vmul.f32 1.0, %v1617
    %v1619 = vrcp.pop %v1601
    %v1620 = vmul.f32 1.0, %v1619
    %v1621 = vrcp.pop %v1602
    %v1622 = vmul.f32 1.0, %v1621
    %v1623 = vrcp.pop %v1603
    %v1624 = vmul.f32 1.0, %v1623
    %v1625 = vrcp.pop %v1604
    %v1626 = vmul.f32 1.0, %v1625
    %v1627 = vrcp.pop %v1605
    %v1628 = vmul.f32 1.0, %v1627
    %v1629 = vrcp.pop %v1606
    %v1630 = vmul.f32 1.0, %v1629
    %v1631 = vrcp.pop %v1607
    %v1632 = vmul.f32 1.0, %v1631
    %v1633 = vrcp.pop %v1608
    %v1634 = vmul.f32 1.0, %v1633
    %v1635 = vrcp.pop %v1609
    %v1636 = vmul.f32 1.0, %v1635
    %v1637 = vrcp.pop %v1610
    %v1638 = vmul.f32 1.0, %v1637
    %1639 = vst [vmem:[#allocation2] sm:$0xff] %v1612
    %1640 = vst [vmem:[#allocation2 + $0x8] sm:$0xff] %v1614
    %1641 = vst [vmem:[#allocation2 + $0x10] sm:$0xff] %v1616
    %1642 = vst [vmem:[#allocation2 + $0x18] sm:$0xff] %v1618
    %1643 = vst [vmem:[#allocation2 + $0x20] sm:$0xff] %v1620
    %1644 = vst [vmem:[#allocation2 + $0x28] sm:$0xff] %v1622
    %1645 = vst.msk [vmem:[#allocation2 + $0x30] sm:$0xff] %vm466, %v1624
    %1646 = vst [vmem:[#allocation2 + $0x38] sm:$0xff] %v1626
    %1647 = vst [vmem:[#allocation2 + $0x40] sm:$0xff] %v1628
    %1648 = vst [vmem:[#allocation2 + $0x48] sm:$0xff] %v1630
    %1649 = vst [vmem:[#allocation2 + $0x50] sm:$0xff] %v1632
    %1650 = vst [vmem:[#allocation2 + $0x58] sm:$0xff] %v1634
    %1651 = vst [vmem:[#allocation2 + $0x60] sm:$0xff] %v1636
    %1652 = vst.msk [vmem:[#allocation2 + $0x68] sm:$0xff] %vm466, %v1638
    // Predicated region
    $region54: #{tpu_custom_call.1} parent=1 // pred_check
      _
    $region55: #{tpu_custom_call.1} parent=1 // pred_check_branch
      %1654 = sbr.rel (0) target = $region57
    $region56: #{tpu_custom_call.1} parent=1 // pred_region
      %s1656 = ssub.s32 1792, 1792
      %1657 = vsyncadd [#allocation3], %s1656
      %s1658 = sshll.u32 [#allocation2], 4
      %s1659 = int_to_ptr.vmem [resolvable:$true] %s1658
      %1664 = dma.vmem_to_hbm [thread:$0]  %s1659, 1792, %s13, [#allocation3], 896, 896, 56
    $region57: #{tpu_custom_call.1} parent=1 // pred_fallthru
      _
    // Predicated region
    $region58: #{tpu_custom_call.1} parent=1 // pred_check
      _
    $region59: #{tpu_custom_call.1} parent=1 // pred_check_branch
      %1666 = sbr.rel (0) target = $region61
    $region60: #{tpu_custom_call.1} parent=1 // pred_region
      %1667 = dma.done [#allocation3], 1792
    $region61: #{tpu_custom_call.1} parent=1 // pred_fallthru
      _
    %1668 = vsyncpa [#allocation3], 1

</llo_original>
